<compile_context>
chip_gen: v7x
topology: tpu7x:2x2x1
jax: 0.10.0
libtpu: 0.0.40
codegen_flags: <defaults>
</compile_context>

<pallas_src>
import functools

import jax
import jax.numpy as jnp
from jax import lax
from jax.experimental import pallas as pl
from jax.experimental.pallas import tpu as pltpu


def _round_up(x, m):
    return ((x + m - 1) // m) * m


def _cdiv(a, b):
    return -(-a // b)


def _vmem_capacity_bytes():
    """Trace-time VMEM query; conservative (v7x per-core) fallback."""
    try:
        cap = getattr(pltpu.get_tpu_info(), "vmem_capacity_bytes", None)
        if cap:
            return int(cap)
    except Exception:
        pass
    return 64 * 1024 * 1024


# ----------------------------- Pallas kernel ------------------------------ #
def cnn_rand_kernel(
    ids_ref,     # (tile_b, l_pad, 1) int32  token ids, pad positions = -1
    table_ref,   # (V_pad, E_pad)     bf16   embedding table (pad rows/cols 0)
    wcol_ref,    # (fmax*E_pad, C_pad) bf16  im2col-fused conv weight
    bmask_ref,   # (l_pad, C_pad)     f32    conv bias + (-1e30) validity mask
    wfc_ref,     # (C_pad, Y_pad)     f32    fc weight (pad rows/cols zero)
    bfc_ref,     # (1, Y_pad)         f32    fc bias   (pad cols -1e30)
    out_ref,     # (tile_b, Y_pad)    f32    softmax probabilities
    emb_ref,     # (tile_b*l_pad + 8, E_pad)    bf16 scratch: gathered emb
    xcol_ref,    # (tile_b*l_pad, fmax*E_pad)   bf16 scratch: im2col slab
    *, tile_b, l_pad, fmax,
):
    m2 = tile_b * l_pad
    e_pad = table_ref.shape[1]
    v_pad = table_ref.shape[0]

    # --- vectorized embedding gather: one-hot @ table (single MXU matmul) ---
    # Pad positions have id == -1 -> all-zero one-hot row -> zero embedding,
    # so the body of the slab needs no memset; only the +8 tail is zeroed.
    ids = ids_ref[...]                                            # (tb,l_pad,1)
    v_iota = lax.broadcasted_iota(jnp.int32, (tile_b, l_pad, v_pad), 2)
    onehot = jnp.where(ids == v_iota, 1.0, 0.0).astype(jnp.bfloat16)
    onehot = onehot.reshape(m2, v_pad)                            # collapse (b,t)
    emb = jnp.dot(onehot, table_ref[...],
                  preferred_element_type=jnp.float32).astype(jnp.bfloat16)
    emb_ref[pl.ds(0, m2), :] = emb
    emb_ref[pl.ds(m2, 8), :] = jnp.zeros((8, e_pad), jnp.bfloat16)  # tail only

    # --- im2col: fold the fmax taps into the matmul K dimension -------------
    for k in range(fmax):                      # fmax is a small static int (5)
        xcol_ref[:, k * e_pad:(k + 1) * e_pad] = emb_ref[pl.ds(k, m2), :]
    acc = jnp.dot(xcol_ref[...], wcol_ref[...],
                  preferred_element_type=jnp.float32)             # (m2, C_pad)

    # --- bias + validity mask + ReLU + single global max-pool ----------------
    # bmask holds the conv bias at valid (t, c) positions and -1e30 at invalid
    # positions / padded channels, so ReLU drives them to exactly 0.
    acc3 = acc.reshape(tile_b, l_pad, acc.shape[-1])
    acc3 = jnp.maximum(acc3 + bmask_ref[...][None, :, :], 0.0)
    pooled = jnp.max(acc3, axis=1)                                # (tile_b, C_pad)

    # --- FC + softmax (dropout == identity at inference) ---------------------
    logits = jnp.dot(pooled, wfc_ref[...],
                     preferred_element_type=jnp.float32) + bfc_ref[...]
    m = jnp.max(logits, axis=-1, keepdims=True)                   # pad cols -1e30
    e = jnp.exp(logits - m)                                       # pad cols -> 0
    out_ref[...] = e / jnp.sum(e, axis=-1, keepdims=True)


# ------------------------------ JAX wrapper ------------------------------- #
@jax.jit
def cnn_rand_forward(x_tokens, params):
    """x_tokens: (B, L) integer token ids; params as produced in __main__."""
    f32, bf16 = jnp.float32, jnp.bfloat16

    table = params["embedding"].astype(bf16)                    # (V, E)
    V, E = table.shape
    filter_sizes = tuple(int(params[f"conv{i}_w"].shape[0]) for i in range(3))
    F = int(params["conv0_w"].shape[2])
    fmax = max(filter_sizes)
    n_br = len(filter_sizes)

    B, L = x_tokens.shape
    Y = int(params["fc_b"].shape[-1])

    v_pad = _round_up(V, 128)
    e_pad = _round_up(E, 128)
    c_dim = n_br * F
    c_pad = _round_up(c_dim, 128)
    y_pad = _round_up(Y, 128)
    # Per-row time padding so the widest filter never reads past its own row
    # at any *valid* position.
    l_pad = _round_up(L + fmax - 1, 8)

    # Embedding table, vocab- and lane-padded (pad rows are never selected).
    table_pad = jnp.pad(table, ((0, v_pad - V), (0, e_pad - E)))

    # im2col conv weight (fmax*E_pad, C_pad): row k*E_pad + e <-> tap k, chan e.
    w_parts, b_parts = [], []
    for i, f in enumerate(filter_sizes):
        w = params[f"conv{i}_w"].astype(bf16)                    # (f, E, F)
        w = jnp.pad(w, ((0, fmax - f), (0, e_pad - E), (0, 0)))  # zero taps/chans
        w_parts.append(w.reshape(fmax * e_pad, F))
        b_parts.append(params[f"conv{i}_b"].astype(f32).reshape(F))
    w_col = jnp.pad(jnp.concatenate(w_parts, axis=1),
                    ((0, 0), (0, c_pad - c_dim)))                # (fmax*E_pad, C_pad)
    b_conv = jnp.pad(jnp.concatenate(b_parts), (0, c_pad - c_dim))

    # Additive bias/validity mask: bias where t < L - f_i + 1 for the branch
    # owning channel c, -1e30 elsewhere (incl. the padded channels).
    limits = jnp.zeros((c_pad,), jnp.int32)
    for i, f in enumerate(filter_sizes):
        limits = limits.at[i * F:(i + 1) * F].set(L - f + 1)
    valid = jnp.arange(l_pad)[:, None] < limits[None, :]
    bmask = jnp.where(valid, b_conv[None, :], -1e30).astype(f32)  # (l_pad, C_pad)

    # FC padded to a lane-dense 128-wide output; pad logits -> -1e30 -> prob 0.
    w_fc = jnp.pad(params["fc_w"].astype(f32),
                   ((0, c_pad - c_dim), (0, y_pad - Y)))
    b_fc = jnp.pad(params["fc_b"].astype(f32), ((0, 0), (0, y_pad - Y)),
                   constant_values=-1e30)

    # ---- batch tiling from a lane-padded VMEM budget -------------------------
    cap = _vmem_capacity_bytes()
    vmem_limit = max(min(cap // 2, 48 * 1024 * 1024), 16 * 1024 * 1024)
    ws_budget = vmem_limit // 2                 # target per-step working set

    bb, bf = 2, 4                               # bf16 / f32 byte widths
    per_row = l_pad * (
        e_pad * bb                              # emb scratch rows
        + fmax * e_pad * bb                     # im2col scratch rows
        + v_pad * bb                            # one-hot value rows
        + 2 * c_pad * bf                        # f32 acc + masked/relu copy
        + 2 * 128 * bf                          # ids block (lane-padded, 2 buf)
    )
    fixed = (
        2 * (v_pad * e_pad + fmax * e_pad * c_pad) * bb          # bf16 weights x2 buf
        + 2 * (l_pad * c_pad + c_pad * y_pad + y_pad) * bf       # f32 weights x2 buf
        + 8 * e_pad * bb                                         # emb scratch tail
        + 2 * 8 * y_pad * bf                                     # output block
    )
    max_tile_b = max(8, ((max(ws_budget - fixed, 0) // max(per_row, 1)) // 8) * 8)

    num_tiles = _cdiv(B, max_tile_b)
    if num_tiles > 1 and num_tiles % 2:
        num_tiles += 1        # even tile count load-balances v7x's 2 TCs;
                              # single-TC chips are never force-split.
    tile_b = _round_up(_cdiv(B, num_tiles), 8)
    b_pad = num_tiles * tile_b

    # Token ids, -1 padded (time + batch pad); trailing unit dim so the
    # in-kernel one-hot compare is a pure lane broadcast (no relayout).
    tok = jnp.pad(x_tokens.astype(jnp.int32),
                  ((0, b_pad - B), (0, l_pad - L)), constant_values=-1)
    tok = tok[:, :, None]                                        # (b_pad, l_pad, 1)

    kernel = functools.partial(cnn_rand_kernel,
                               tile_b=tile_b, l_pad=l_pad, fmax=fmax)

    def full(shape):
        zeros = (0,) * len(shape)
        return pl.BlockSpec(shape, lambda i, _z=zeros: _z)

    m2 = tile_b * l_pad
    grid_spec = pltpu.PrefetchScalarGridSpec(
        num_scalar_prefetch=0,
        grid=(num_tiles,),
        in_specs=[
            pl.BlockSpec((tile_b, l_pad, 1), lambda i: (i, 0, 0)),   # token ids
            full(table_pad.shape),
            full(w_col.shape),
            full(bmask.shape),
            full(w_fc.shape),
            full(b_fc.shape),
        ],
        out_specs=pl.BlockSpec((tile_b, y_pad), lambda i: (i, 0)),
        scratch_shapes=[
            pltpu.VMEM((m2 + 8, e_pad), bf16),          # gathered embeddings
            pltpu.VMEM((m2, fmax * e_pad), bf16),       # im2col slab
        ],
    )

    out = pl.pallas_call(
        kernel,
        out_shape=jax.ShapeDtypeStruct((b_pad, y_pad), f32),
        grid_spec=grid_spec,
        compiler_params=pltpu.CompilerParams(
            dimension_semantics=("parallel",),
            vmem_limit_bytes=int(vmem_limit)),
    )(tok, table_pad, w_col, bmask, w_fc, b_fc)

    return out[:B, :Y]


# ------------------------- pure-JAX reference (check) ---------------------- #
def cnn_rand_reference(x_tokens, params):
    # Match the kernel's dtype choices: bf16 embedding/conv weights, f32 math.
    table = params["embedding"].astype(jnp.bfloat16).astype(jnp.float32)
    emb = jnp.take(table, x_tokens, axis=0)                    # (B, L, E)
    pools = []
    for i in range(3):
        w = params[f"conv{i}_w"].astype(jnp.bfloat16).astype(jnp.float32)
        b = params[f"conv{i}_b"].astype(jnp.float32)
        f = w.shape[0]
        L = emb.shape[1]
        l_out = L - f + 1
        acc = jnp.zeros((emb.shape[0], l_out, w.shape[2]), jnp.float32)
        for k in range(f):
            acc = acc + jnp.einsum("ble,ef->blf", emb[:, k:k + l_out, :], w[k])
        acc = jnp.maximum(acc + b[None, :, :], 0.0)
        pools.append(jnp.max(acc, axis=1))                     # (B, F)
    pooled = jnp.concatenate(pools, axis=1)                    # (B, 3F)
    logits = pooled @ params["fc_w"].astype(jnp.float32) \
        + params["fc_b"].astype(jnp.float32)
    return jax.nn.softmax(logits, axis=-1)


# --------------------------------- main ------------------------------------ #
if __name__ == "__main__":
    # Small, module-consistent shapes.
    vocab_size = 50       # len(vocab) + 1
    embedding_size = 32   # E
    num_filters = 16      # F
    filters = (3, 4, 5)
    y_dim = 4             # number of classes
    batch = 2
    seq_len = 16          # L

    key = jax.random.PRNGKey(0)
    keys = jax.random.split(key, 10)

    def uniform(k, shape, scale):
        return jax.random.uniform(k, shape, jnp.float32, -scale, scale)

    params = {
        # nn.Embedding(vocab_size, embedding_size): N(0, 1)
        "embedding": jax.random.normal(keys[0], (vocab_size, embedding_size),
                                       jnp.float32),
    }
    # Conv1d(E, F, f): PyTorch weight (F, E, f); stored here as (f, E, F).
    for i, (f, kw, kb) in enumerate(zip(filters, keys[1:4], keys[4:7])):
        scale = 1.0 / (embedding_size * f) ** 0.5
        params[f"conv{i}_w"] = uniform(kw, (f, embedding_size, num_filters), scale)
        params[f"conv{i}_b"] = uniform(kb, (1, num_filters), scale)
    # Linear(3F, y_dim): PyTorch weight (y_dim, 3F); stored here as (3F, y_dim).
    fc_in = len(filters) * num_filters
    fc_scale = 1.0 / fc_in ** 0.5
    params["fc_w"] = uniform(keys[7], (fc_in, y_dim), fc_scale)
    params["fc_b"] = uniform(keys[8], (1, y_dim), fc_scale)

    x_tokens = jax.random.randint(keys[9], (batch, seq_len), 0, vocab_size,
                                  jnp.int32)

    out = cnn_rand_forward(x_tokens, params)
    out = jax.block_until_ready(out)

    ref = cnn_rand_reference(x_tokens, params)
    assert out.shape == (batch, y_dim)
    assert jnp.allclose(jnp.sum(out, axis=-1), 1.0, atol=1e-5)
    # bf16 conv inputs / MXU accumulation order => modest tolerance vs f32 ref.
    assert jnp.allclose(out, ref, atol=5e-4, rtol=5e-3), (out, ref)

    print("KERNEL_OK")
</pallas_src>

<mosaic_0001>
module attributes {stable_mosaic.version = 11 : i64} {
  func.func @cnn_rand_kernel(%arg0: i32, %arg1: memref<8x24x1xi32, #tpu.memory_space<vmem>>, %arg2: memref<128x128xbf16, #tpu.memory_space<vmem>>, %arg3: memref<640x128xbf16, #tpu.memory_space<vmem>>, %arg4: memref<24x128xf32, #tpu.memory_space<vmem>>, %arg5: memref<128x128xf32, #tpu.memory_space<vmem>>, %arg6: memref<1x128xf32, #tpu.memory_space<vmem>>, %arg7: memref<8x128xf32, #tpu.memory_space<vmem>>, %arg8: memref<200x128xbf16, #tpu.memory_space<vmem>>, %arg9: memref<192x640xbf16, #tpu.memory_space<vmem>>) attributes {dimension_semantics = [#tpu.dimension_semantics<parallel>], iteration_bounds = array<i64: 1>, scalar_prefetch = 0 : i64, scratch_operands = 2 : i64, tpu.core_type = #tpu.core_type<tc>, window_params = [{transform_indices = @transform_0, window_bounds = array<i64: 8, 24, 1>}, {pipeline_mode = #tpu.pipeline_mode<synchronous>, transform_indices = @transform_1, window_bounds = array<i64: 128, 128>}, {pipeline_mode = #tpu.pipeline_mode<synchronous>, transform_indices = @transform_2, window_bounds = array<i64: 640, 128>}, {pipeline_mode = #tpu.pipeline_mode<synchronous>, transform_indices = @transform_3, window_bounds = array<i64: 24, 128>}, {pipeline_mode = #tpu.pipeline_mode<synchronous>, transform_indices = @transform_4, window_bounds = array<i64: 128, 128>}, {pipeline_mode = #tpu.pipeline_mode<synchronous>, transform_indices = @transform_5, window_bounds = array<i64: 1, 128>}, {transform_indices = @transform_6, window_bounds = array<i64: 8, 128>}]} {
    %c0 = arith.constant 0 : index
    %c0_0 = arith.constant 0 : index
    %c0_1 = arith.constant 0 : index
    %0 = vector.load %arg1[%c0, %c0_0, %c0_1] : memref<8x24x1xi32, #tpu.memory_space<vmem>>, vector<8x24x1xi32>
    %1 = tpu.iota {dimensions = array<i32: 2>} : vector<8x24x128xi32>
    %2 = vector.broadcast %0 : vector<8x24x1xi32> to vector<8x24x128xi32>
    %3 = arith.cmpi eq, %2, %1 : vector<8x24x128xi32>
    %cst = arith.constant 1.000000e+00 : f32
    %cst_2 = arith.constant 0.000000e+00 : f32
    %4 = vector.broadcast %cst : f32 to vector<8x24x128xf32>
    %5 = vector.broadcast %cst_2 : f32 to vector<8x24x128xf32>
    %6 = arith.select %3, %4, %5 : vector<8x24x128xi1>, vector<8x24x128xf32>
    %7 = arith.truncf %6 : vector<8x24x128xf32> to vector<8x24x128xbf16>
    %8 = vector.shape_cast %7 : vector<8x24x128xbf16> to vector<192x128xbf16>
    %c0_3 = arith.constant 0 : index
    %c0_4 = arith.constant 0 : index
    %9 = vector.load %arg2[%c0_3, %c0_4] : memref<128x128xbf16, #tpu.memory_space<vmem>>, vector<128x128xbf16>
    %cst_5 = arith.constant dense<0.000000e+00> : vector<192x128xf32>
    %10 = tpu.matmul %8, %9, %cst_5 {dimension_numbers = #tpu.dot_dimension_numbers<[1], [0], [0], [1], [0, 0, 1, 1], [], []>} : vector<192x128xbf16>, vector<128x128xbf16>, vector<192x128xf32> -> vector<192x128xf32>
    %11 = arith.truncf %10 : vector<192x128xf32> to vector<192x128xbf16>
    %c0_6 = arith.constant 0 : index
    %c0_7 = arith.constant 0 : index
    %12 = vector.load %arg8[%c0_6, %c0_7] : memref<200x128xbf16, #tpu.memory_space<vmem>>, vector<192x128xbf16>
    tpu.vector_store %arg8[%c0_6, %c0_7], %11 {strides = array<i32>} : memref<200x128xbf16, #tpu.memory_space<vmem>>, vector<192x128xbf16>,
    %cst_8 = arith.constant 0.000000e+00 : bf16
    %13 = vector.broadcast %cst_8 : bf16 to vector<8x128xbf16>
    %c192 = arith.constant 192 : index
    %c0_9 = arith.constant 0 : index
    %14 = vector.load %arg8[%c192, %c0_9] : memref<200x128xbf16, #tpu.memory_space<vmem>>, vector<8x128xbf16>
    tpu.vector_store %arg8[%c192, %c0_9], %13 {strides = array<i32>} : memref<200x128xbf16, #tpu.memory_space<vmem>>, vector<8x128xbf16>,
    %c0_10 = arith.constant 0 : index
    %c0_11 = arith.constant 0 : index
    %15 = vector.load %arg8[%c0_10, %c0_11] : memref<200x128xbf16, #tpu.memory_space<vmem>>, vector<192x128xbf16>
    %c0_12 = arith.constant 0 : index
    %c0_13 = arith.constant 0 : index
    %16 = vector.load %arg9[%c0_12, %c0_13] : memref<192x640xbf16, #tpu.memory_space<vmem>>, vector<192x128xbf16>
    tpu.vector_store %arg9[%c0_12, %c0_13], %15 {strides = array<i32>} : memref<192x640xbf16, #tpu.memory_space<vmem>>, vector<192x128xbf16>,
    %c1 = arith.constant 1 : index
    %c0_14 = arith.constant 0 : index
    %17 = vector.load %arg8[%c1, %c0_14] : memref<200x128xbf16, #tpu.memory_space<vmem>>, vector<192x128xbf16>
    %c0_15 = arith.constant 0 : index
    %c128 = arith.constant 128 : index
    %18 = vector.load %arg9[%c0_15, %c128] : memref<192x640xbf16, #tpu.memory_space<vmem>>, vector<192x128xbf16>
    tpu.vector_store %arg9[%c0_15, %c128], %17 {strides = array<i32>} : memref<192x640xbf16, #tpu.memory_space<vmem>>, vector<192x128xbf16>,
    %c2 = arith.constant 2 : index
    %c0_16 = arith.constant 0 : index
    %19 = vector.load %arg8[%c2, %c0_16] : memref<200x128xbf16, #tpu.memory_space<vmem>>, vector<192x128xbf16>
    %c0_17 = arith.constant 0 : index
    %c256 = arith.constant 256 : index
    %20 = vector.load %arg9[%c0_17, %c256] : memref<192x640xbf16, #tpu.memory_space<vmem>>, vector<192x128xbf16>
    tpu.vector_store %arg9[%c0_17, %c256], %19 {strides = array<i32>} : memref<192x640xbf16, #tpu.memory_space<vmem>>, vector<192x128xbf16>,
    %c3 = arith.constant 3 : index
    %c0_18 = arith.constant 0 : index
    %21 = vector.load %arg8[%c3, %c0_18] : memref<200x128xbf16, #tpu.memory_space<vmem>>, vector<192x128xbf16>
    %c0_19 = arith.constant 0 : index
    %c384 = arith.constant 384 : index
    %22 = vector.load %arg9[%c0_19, %c384] : memref<192x640xbf16, #tpu.memory_space<vmem>>, vector<192x128xbf16>
    tpu.vector_store %arg9[%c0_19, %c384], %21 {strides = array<i32>} : memref<192x640xbf16, #tpu.memory_space<vmem>>, vector<192x128xbf16>,
    %c4 = arith.constant 4 : index
    %c0_20 = arith.constant 0 : index
    %23 = vector.load %arg8[%c4, %c0_20] : memref<200x128xbf16, #tpu.memory_space<vmem>>, vector<192x128xbf16>
    %c0_21 = arith.constant 0 : index
    %c512 = arith.constant 512 : index
    %24 = vector.load %arg9[%c0_21, %c512] : memref<192x640xbf16, #tpu.memory_space<vmem>>, vector<192x128xbf16>
    tpu.vector_store %arg9[%c0_21, %c512], %23 {strides = array<i32>} : memref<192x640xbf16, #tpu.memory_space<vmem>>, vector<192x128xbf16>,
    %c0_22 = arith.constant 0 : index
    %c0_23 = arith.constant 0 : index
    %25 = vector.load %arg9[%c0_22, %c0_23] : memref<192x640xbf16, #tpu.memory_space<vmem>>, vector<192x640xbf16>
    %c0_24 = arith.constant 0 : index
    %c0_25 = arith.constant 0 : index
    %26 = vector.load %arg3[%c0_24, %c0_25] : memref<640x128xbf16, #tpu.memory_space<vmem>>, vector<640x128xbf16>
    %cst_26 = arith.constant dense<0.000000e+00> : vector<192x128xf32>
    %27 = tpu.matmul %25, %26, %cst_26 {dimension_numbers = #tpu.dot_dimension_numbers<[1], [0], [0], [1], [0, 0, 1, 1], [], []>} : vector<192x640xbf16>, vector<640x128xbf16>, vector<192x128xf32> -> vector<192x128xf32>
    %28 = vector.shape_cast %27 : vector<192x128xf32> to vector<8x24x128xf32>
    %c0_27 = arith.constant 0 : index
    %c0_28 = arith.constant 0 : index
    %29 = vector.load %arg4[%c0_27, %c0_28] : memref<24x128xf32, #tpu.memory_space<vmem>>, vector<24x128xf32>
    %30 = vector.shape_cast %29 : vector<24x128xf32> to vector<1x24x128xf32>
    %31 = vector.broadcast %30 : vector<1x24x128xf32> to vector<8x24x128xf32>
    %32 = arith.addf %28, %31 : vector<8x24x128xf32>
    %cst_29 = arith.constant 0.000000e+00 : f32
    %33 = vector.broadcast %cst_29 : f32 to vector<8x24x128xf32>
    %34 = arith.maximumf %32, %33 : vector<8x24x128xf32>
    %cst_30 = arith.constant dense<0xFF800000> : vector<8x128xf32>
    %35 = vector.multi_reduction <maximumf>, %34, %cst_30 [1] : vector<8x24x128xf32> to vector<8x128xf32>
    %c0_31 = arith.constant 0 : index
    %c0_32 = arith.constant 0 : index
    %36 = vector.load %arg5[%c0_31, %c0_32] : memref<128x128xf32, #tpu.memory_space<vmem>>, vector<128x128xf32>
    %cst_33 = arith.constant dense<0.000000e+00> : vector<8x128xf32>
    %37 = tpu.matmul %35, %36, %cst_33 {dimension_numbers = #tpu.dot_dimension_numbers<[1], [0], [0], [1], [0, 0, 1, 1], [], []>} : vector<8x128xf32>, vector<128x128xf32>, vector<8x128xf32> -> vector<8x128xf32>
    %c0_34 = arith.constant 0 : index
    %c0_35 = arith.constant 0 : index
    %38 = vector.load %arg6[%c0_34, %c0_35] : memref<1x128xf32, #tpu.memory_space<vmem>>, vector<1x128xf32>
    %39 = vector.broadcast %38 : vector<1x128xf32> to vector<8x128xf32>
    %40 = arith.addf %37, %39 : vector<8x128xf32>
    %cst_36 = arith.constant dense<0xFF800000> : vector<8xf32>
    %41 = vector.multi_reduction <maximumf>, %40, %cst_36 [1] : vector<8x128xf32> to vector<8xf32>
    %42 = vector.shape_cast %41 : vector<8xf32> to vector<8x1xf32>
    %43 = vector.broadcast %42 : vector<8x1xf32> to vector<8x128xf32>
    %44 = arith.subf %40, %43 : vector<8x128xf32>
    %45 = math.exp %44 : vector<8x128xf32>
    %cst_37 = arith.constant dense<0.000000e+00> : vector<8xf32>
    %46 = vector.multi_reduction <add>, %45, %cst_37 [1] : vector<8x128xf32> to vector<8xf32>
    %47 = vector.shape_cast %46 : vector<8xf32> to vector<8x1xf32>
    %48 = vector.broadcast %47 : vector<8x1xf32> to vector<8x128xf32>
    %49 = arith.divf %45, %48 : vector<8x128xf32>
    %c0_38 = arith.constant 0 : index
    %c0_39 = arith.constant 0 : index
    %50 = vector.load %arg7[%c0_38, %c0_39] : memref<8x128xf32, #tpu.memory_space<vmem>>, vector<8x128xf32>
    tpu.vector_store %arg7[%c0_38, %c0_39], %49 {strides = array<i32>} : memref<8x128xf32, #tpu.memory_space<vmem>>, vector<8x128xf32>,
    return
  }
  func.func @transform_0(%arg0: i32) -> (i32, i32, i32) {
    %c0_i32 = arith.constant 0 : i32
    %c0_i32_0 = arith.constant 0 : i32
    %c0_i32_1 = arith.constant 0 : i32
    return %arg0, %c0_i32, %c0_i32_0 : i32, i32, i32
  }
  func.func @transform_1(%arg0: i32) -> (i32, i32) {
    %c0_i32 = arith.constant 0 : i32
    %c0_i32_0 = arith.constant 0 : i32
    %c0_i32_1 = arith.constant 0 : i32
    return %c0_i32, %c0_i32_0 : i32, i32
  }
  func.func @transform_2(%arg0: i32) -> (i32, i32) {
    %c0_i32 = arith.constant 0 : i32
    %c0_i32_0 = arith.constant 0 : i32
    %c0_i32_1 = arith.constant 0 : i32
    return %c0_i32, %c0_i32_0 : i32, i32
  }
  func.func @transform_3(%arg0: i32) -> (i32, i32) {
    %c0_i32 = arith.constant 0 : i32
    %c0_i32_0 = arith.constant 0 : i32
    %c0_i32_1 = arith.constant 0 : i32
    return %c0_i32, %c0_i32_0 : i32, i32
  }
  func.func @transform_4(%arg0: i32) -> (i32, i32) {
    %c0_i32 = arith.constant 0 : i32
    %c0_i32_0 = arith.constant 0 : i32
    %c0_i32_1 = arith.constant 0 : i32
    return %c0_i32, %c0_i32_0 : i32, i32
  }
  func.func @transform_5(%arg0: i32) -> (i32, i32) {
    %c0_i32 = arith.constant 0 : i32
    %c0_i32_0 = arith.constant 0 : i32
    %c0_i32_1 = arith.constant 0 : i32
    return %c0_i32, %c0_i32_0 : i32, i32
  }
  func.func @transform_6(%arg0: i32) -> (i32, i32) {
    %c0_i32 = arith.constant 0 : i32
    %c0_i32_0 = arith.constant 0 : i32
    return %arg0, %c0_i32 : i32, i32
  }
}

</mosaic_0001>

<llo_original>
// kernel: cnn_rand_forward.1
$region0: #{cnn_rand_forward.1}
  #allocation0 [shape = 'u32[]', space=smem, size = 0x4, offset = 0x4, fixed_abs, tag = 'smem constant byte address 0x4 - core index']
  #allocation1 [shape = 'u32[144,128]{1,0:T(1,128)}', space=vmem, size = 0x12000, scoped, tag = 'internal scratch']
  #allocation2 [shape = 'bf16[200,128]{1,0:T(8,128)(2,1)}', space=vmem, size = 0xc800, scoped, tag = 'scratch operand']
  #allocation3 [shape = 'bf16[192,640]{1,0:T(16,128)(2,1)}', space=vmem, size = 0x3c000, scoped, tag = 'scratch operand']
  %s0 = inlined_call_operand.vmem [shape: s32[8,24,1], index: 0, kind: input, shape index: {}]
  %s1 = inlined_call_operand.vmem [shape: bf16[128,128], index: 1, kind: input, shape index: {}]
  %s2 = inlined_call_operand.vmem [shape: bf16[640,128], index: 2, kind: input, shape index: {}]
  %s3 = inlined_call_operand.vmem [shape: f32[24,128], index: 3, kind: input, shape index: {}]
  %s4 = inlined_call_operand.vmem [shape: f32[128,128], index: 4, kind: input, shape index: {}]
  %s5 = inlined_call_operand.vmem [shape: f32[1,128], index: 5, kind: input, shape index: {}]
  %s6 = inlined_call_operand.vmem [shape: f32[8,128], index: 6, kind: output, shape index: {}]
  %s7 = sld [smem:[#allocation0]]
  $region34: #{cnn_rand_forward.1} parent=0
    _
  %s9 = ssub.s32 1, %s7
  %s10 = scalar_select 0, %s9, %s7
  // Predicated region
  $region2: #{cnn_rand_forward.1} parent=0 // pred_check
    _
  $region3: #{cnn_rand_forward.1} parent=0 // pred_check_branch
    %12 = sbr.rel (0) target = $region5
  $region4: #{cnn_rand_forward.1} parent=0 // pred_region
    _
  $region5: #{cnn_rand_forward.1} parent=0 // pred_fallthru
    _
  // Predicated region
  $region6: #{cnn_rand_forward.1} parent=0 // pred_check
    _
  $region7: #{cnn_rand_forward.1} parent=0 // pred_check_branch
    %14 = sbr.rel (0) target = $region9
  $region8: #{cnn_rand_forward.1} parent=0 // pred_region
    _
  $region9: #{cnn_rand_forward.1} parent=0 // pred_fallthru
    _
  // Predicated region
  $region10: #{cnn_rand_forward.1} parent=0 // pred_check
    _
  $region11: #{cnn_rand_forward.1} parent=0 // pred_check_branch
    %16 = sbr.rel (0) target = $region13
  $region12: #{cnn_rand_forward.1} parent=0 // pred_region
    _
  $region13: #{cnn_rand_forward.1} parent=0 // pred_fallthru
    _
  // Predicated region
  $region14: #{cnn_rand_forward.1} parent=0 // pred_check
    _
  $region15: #{cnn_rand_forward.1} parent=0 // pred_check_branch
    %18 = sbr.rel (0) target = $region17
  $region16: #{cnn_rand_forward.1} parent=0 // pred_region
    _
  $region17: #{cnn_rand_forward.1} parent=0 // pred_fallthru
    _
  // Predicated region
  $region18: #{cnn_rand_forward.1} parent=0 // pred_check
    _
  $region19: #{cnn_rand_forward.1} parent=0 // pred_check_branch
    %20 = sbr.rel (0) target = $region21
  $region20: #{cnn_rand_forward.1} parent=0 // pred_region
    _
  $region21: #{cnn_rand_forward.1} parent=0 // pred_fallthru
    _
  // Predicated region
  $region22: #{cnn_rand_forward.1} parent=0 // pred_check
    _
  $region23: #{cnn_rand_forward.1} parent=0 // pred_check_branch
    %22 = sbr.rel (0) target = $region25
  $region24: #{cnn_rand_forward.1} parent=0 // pred_region
    _
  $region25: #{cnn_rand_forward.1} parent=0 // pred_fallthru
    _
  %v24 = vld [vmem:[%s0] sm:$0xff]
  %v25 = vld [vmem:[%s0 + $0x8] sm:$0xff]
  %v26 = vld [vmem:[%s0 + $0x10] sm:$0xff]
  %v27 = vld [vmem:[%s0 + $0x18] sm:$0xff]
  %v28 = vld [vmem:[%s0 + $0x20] sm:$0xff]
  %v29 = vld [vmem:[%s0 + $0x28] sm:$0xff]
  %v30 = vld [vmem:[%s0 + $0x30] sm:$0xff]
  %v31 = vld [vmem:[%s0 + $0x38] sm:$0xff]
  %v32 = vld [vmem:[%s0 + $0x40] sm:$0xff]
  %v33 = vld [vmem:[%s0 + $0x48] sm:$0xff]
  %v34 = vld [vmem:[%s0 + $0x50] sm:$0xff]
  %v35 = vld [vmem:[%s0 + $0x58] sm:$0xff]
  %v36 = vld [vmem:[%s0 + $0x60] sm:$0xff]
  %v37 = vld [vmem:[%s0 + $0x68] sm:$0xff]
  %v38 = vld [vmem:[%s0 + $0x70] sm:$0xff]
  %v39 = vld [vmem:[%s0 + $0x78] sm:$0xff]
  %v40 = vld [vmem:[%s0 + $0x80] sm:$0xff]
  %v41 = vld [vmem:[%s0 + $0x88] sm:$0xff]
  %v42 = vld [vmem:[%s0 + $0x90] sm:$0xff]
  %v43 = vld [vmem:[%s0 + $0x98] sm:$0xff]
  %v44 = vld [vmem:[%s0 + $0xa0] sm:$0xff]
  %v45 = vld [vmem:[%s0 + $0xa8] sm:$0xff]
  %v46 = vld [vmem:[%s0 + $0xb0] sm:$0xff]
  %v47 = vld [vmem:[%s0 + $0xb8] sm:$0xff]
  %v48 = vlaneseq
  %v49 = vand.u32 %v48, 127
  %50 = vset.pattern.permute.xlu0 0
  %51 = vperm.xlu0 %50, %v24
  %v52 = vpop.permute.xlu0 %51
  %53 = vset.pattern.permute.xlu0 0
  %54 = vperm.xlu0 %53, %v25
  %v55 = vpop.permute.xlu0 %54
  %56 = vset.pattern.permute.xlu0 0
  %57 = vperm.xlu0 %56, %v26
  %v58 = vpop.permute.xlu0 %57
  %59 = vset.pattern.permute.xlu0 0
  %60 = vperm.xlu0 %59, %v27
  %v61 = vpop.permute.xlu0 %60
  %62 = vset.pattern.permute.xlu0 0
  %63 = vperm.xlu0 %62, %v28
  %v64 = vpop.permute.xlu0 %63
  %65 = vset.pattern.permute.xlu0 0
  %66 = vperm.xlu0 %65, %v29
  %v67 = vpop.permute.xlu0 %66
  %68 = vset.pattern.permute.xlu0 0
  %69 = vperm.xlu0 %68, %v30
  %v70 = vpop.permute.xlu0 %69
  %71 = vset.pattern.permute.xlu0 0
  %72 = vperm.xlu0 %71, %v31
  %v73 = vpop.permute.xlu0 %72
  %74 = vset.pattern.permute.xlu0 0
  %75 = vperm.xlu0 %74, %v32
  %v76 = vpop.permute.xlu0 %75
  %77 = vset.pattern.permute.xlu0 0
  %78 = vperm.xlu0 %77, %v33
  %v79 = vpop.permute.xlu0 %78
  %80 = vset.pattern.permute.xlu0 0
  %81 = vperm.xlu0 %80, %v34
  %v82 = vpop.permute.xlu0 %81
  %83 = vset.pattern.permute.xlu0 0
  %84 = vperm.xlu0 %83, %v35
  %v85 = vpop.permute.xlu0 %84
  %86 = vset.pattern.permute.xlu0 0
  %87 = vperm.xlu0 %86, %v36
  %v88 = vpop.permute.xlu0 %87
  %89 = vset.pattern.permute.xlu0 0
  %90 = vperm.xlu0 %89, %v37
  %v91 = vpop.permute.xlu0 %90
  %92 = vset.pattern.permute.xlu0 0
  %93 = vperm.xlu0 %92, %v38
  %v94 = vpop.permute.xlu0 %93
  %95 = vset.pattern.permute.xlu0 0
  %96 = vperm.xlu0 %95, %v39
  %v97 = vpop.permute.xlu0 %96
  %98 = vset.pattern.permute.xlu0 0
  %99 = vperm.xlu0 %98, %v40
  %v100 = vpop.permute.xlu0 %99
  %101 = vset.pattern.permute.xlu0 0
  %102 = vperm.xlu0 %101, %v41
  %v103 = vpop.permute.xlu0 %102
  %104 = vset.pattern.permute.xlu0 0
  %105 = vperm.xlu0 %104, %v42
  %v106 = vpop.permute.xlu0 %105
  %107 = vset.pattern.permute.xlu0 0
  %108 = vperm.xlu0 %107, %v43
  %v109 = vpop.permute.xlu0 %108
  %110 = vset.pattern.permute.xlu0 0
  %111 = vperm.xlu0 %110, %v44
  %v112 = vpop.permute.xlu0 %111
  %113 = vset.pattern.permute.xlu0 0
  %114 = vperm.xlu0 %113, %v45
  %v115 = vpop.permute.xlu0 %114
  %116 = vset.pattern.permute.xlu0 0
  %117 = vperm.xlu0 %116, %v46
  %v118 = vpop.permute.xlu0 %117
  %119 = vset.pattern.permute.xlu0 0
  %120 = vperm.xlu0 %119, %v47
  %v121 = vpop.permute.xlu0 %120
  %vm122 = vcmp.eq.s32.totalorder %v52, %v49
  %vm123 = vcmp.eq.s32.totalorder %v55, %v49
  %vm124 = vcmp.eq.s32.totalorder %v58, %v49
  %vm125 = vcmp.eq.s32.totalorder %v61, %v49
  %vm126 = vcmp.eq.s32.totalorder %v64, %v49
  %vm127 = vcmp.eq.s32.totalorder %v67, %v49
  %vm128 = vcmp.eq.s32.totalorder %v70, %v49
  %vm129 = vcmp.eq.s32.totalorder %v73, %v49
  %vm130 = vcmp.eq.s32.totalorder %v76, %v49
  %vm131 = vcmp.eq.s32.totalorder %v79, %v49
  %vm132 = vcmp.eq.s32.totalorder %v82, %v49
  %vm133 = vcmp.eq.s32.totalorder %v85, %v49
  %vm134 = vcmp.eq.s32.totalorder %v88, %v49
  %vm135 = vcmp.eq.s32.totalorder %v91, %v49
  %vm136 = vcmp.eq.s32.totalorder %v94, %v49
  %vm137 = vcmp.eq.s32.totalorder %v97, %v49
  %vm138 = vcmp.eq.s32.totalorder %v100, %v49
  %vm139 = vcmp.eq.s32.totalorder %v103, %v49
  %vm140 = vcmp.eq.s32.totalorder %v106, %v49
  %vm141 = vcmp.eq.s32.totalorder %v109, %v49
  %vm142 = vcmp.eq.s32.totalorder %v112, %v49
  %vm143 = vcmp.eq.s32.totalorder %v115, %v49
  %vm144 = vcmp.eq.s32.totalorder %v118, %v49
  %vm145 = vcmp.eq.s32.totalorder %v121, %v49
  %v146 = vsel %vm122, 1.0, 0.0
  %v147 = vsel %vm123, 1.0, 0.0
  %v148 = vsel %vm124, 1.0, 0.0
  %v149 = vsel %vm125, 1.0, 0.0
  %v150 = vsel %vm126, 1.0, 0.0
  %v151 = vsel %vm127, 1.0, 0.0
  %v152 = vsel %vm128, 1.0, 0.0
  %v153 = vsel %vm129, 1.0, 0.0
  %v154 = vsel %vm130, 1.0, 0.0
  %v155 = vsel %vm131, 1.0, 0.0
  %v156 = vsel %vm132, 1.0, 0.0
  %v157 = vsel %vm133, 1.0, 0.0
  %v158 = vsel %vm134, 1.0, 0.0
  %v159 = vsel %vm135, 1.0, 0.0
  %v160 = vsel %vm136, 1.0, 0.0
  %v161 = vsel %vm137, 1.0, 0.0
  %v162 = vsel %vm138, 1.0, 0.0
  %v163 = vsel %vm139, 1.0, 0.0
  %v164 = vsel %vm140, 1.0, 0.0
  %v165 = vsel %vm141, 1.0, 0.0
  %v166 = vsel %vm142, 1.0, 0.0
  %v167 = vsel %vm143, 1.0, 0.0
  %v168 = vsel %vm144, 1.0, 0.0
  %v169 = vsel %vm145, 1.0, 0.0
  %v170 = vpack.c.bf16 %v147, %v146
  %v171 = vpack.c.bf16 %v148, %v148
  %v172 = vpack.c.bf16 %v150, %v149
  %v173 = vpack.c.bf16 %v151, %v151
  %v174 = vpack.c.bf16 %v153, %v152
  %v175 = vpack.c.bf16 %v154, %v154
  %v176 = vpack.c.bf16 %v156, %v155
  %v177 = vpack.c.bf16 %v157, %v157
  %v178 = vpack.c.bf16 %v159, %v158
  %v179 = vpack.c.bf16 %v160, %v160
  %v180 = vpack.c.bf16 %v162, %v161
  %v181 = vpack.c.bf16 %v163, %v163
  %v182 = vpack.c.bf16 %v165, %v164
  %v183 = vpack.c.bf16 %v166, %v166
  %v184 = vpack.c.bf16 %v168, %v167
  %v185 = vpack.c.bf16 %v169, %v169
  %v202 = vunpack.c.l.b16 %v170
  %v203 = vunpack.c.h.b16 %v170
  %v204 = vunpack.c.l.b16 %v171
  %v205 = vunpack.c.l.b16 %v172
  %v206 = vunpack.c.h.b16 %v172
  %v207 = vunpack.c.l.b16 %v173
  %v208 = vunpack.c.l.b16 %v174
  %v209 = vunpack.c.h.b16 %v174
  %v210 = vunpack.c.l.b16 %v175
  %v211 = vunpack.c.l.b16 %v176
  %v212 = vunpack.c.h.b16 %v176
  %v213 = vunpack.c.l.b16 %v177
  %v214 = vunpack.c.l.b16 %v178
  %v215 = vunpack.c.h.b16 %v178
  %v216 = vunpack.c.l.b16 %v179
  %v217 = vunpack.c.l.b16 %v180
  %v218 = vunpack.c.h.b16 %v180
  %v219 = vunpack.c.l.b16 %v181
  %v220 = vunpack.c.l.b16 %v182
  %v221 = vunpack.c.h.b16 %v182
  %v222 = vunpack.c.l.b16 %v183
  %v223 = vunpack.c.l.b16 %v184
  %v224 = vunpack.c.h.b16 %v184
  %v225 = vunpack.c.l.b16 %v185
  %v226 = vld [vmem:[%s1] sm:$0xf]
  %v227 = vld [vmem:[%s1 + $0x4] sm:$0xf]
  %v228 = vld [vmem:[%s1 + $0x8] sm:$0xf]
  %v229 = vld [vmem:[%s1 + $0xc] sm:$0xf]
  %v230 = vld [vmem:[%s1 + $0x10] sm:$0xf]
  %v231 = vld [vmem:[%s1 + $0x14] sm:$0xf]
  %v232 = vld [vmem:[%s1 + $0x18] sm:$0xf]
  %v233 = vld [vmem:[%s1 + $0x1c] sm:$0xf]
  %v234 = vld [vmem:[%s1 + $0x20] sm:$0xf]
  %v235 = vld [vmem:[%s1 + $0x24] sm:$0xf]
  %v236 = vld [vmem:[%s1 + $0x28] sm:$0xf]
  %v237 = vld [vmem:[%s1 + $0x2c] sm:$0xf]
  %v238 = vld [vmem:[%s1 + $0x30] sm:$0xf]
  %v239 = vld [vmem:[%s1 + $0x34] sm:$0xf]
  %v240 = vld [vmem:[%s1 + $0x38] sm:$0xf]
  %v241 = vld [vmem:[%s1 + $0x3c] sm:$0xf]
  %v242 = vpack.c.b16 %v203, %v202
  %v243 = vpack.c.b16 %v205, %v204
  %v244 = vpack.c.b16 %v207, %v206
  %v245 = vpack.c.b16 %v209, %v208
  %v246 = vpack.c.b16 %v211, %v210
  %v247 = vpack.c.b16 %v213, %v212
  %v248 = vpack.c.b16 %v215, %v214
  %v249 = vpack.c.b16 %v217, %v216
  %v250 = vpack.c.b16 %v219, %v218
  %v251 = vpack.c.b16 %v221, %v220
  %v252 = vpack.c.b16 %v223, %v222
  %v253 = vpack.c.b16 %v225, %v224
  %v282 = vunpack.c.l.b16 %v226
  %v283 = vunpack.c.l.b16 %v227
  %v284 = vunpack.c.l.b16 %v228
  %v285 = vunpack.c.l.b16 %v229
  %v286 = vunpack.c.l.b16 %v230
  %v287 = vunpack.c.l.b16 %v231
  %v288 = vunpack.c.l.b16 %v232
  %v289 = vunpack.c.l.b16 %v233
  %v290 = vunpack.c.l.b16 %v234
  %v291 = vunpack.c.l.b16 %v235
  %v292 = vunpack.c.l.b16 %v236
  %v293 = vunpack.c.l.b16 %v237
  %v294 = vunpack.c.l.b16 %v238
  %v295 = vunpack.c.l.b16 %v239
  %v296 = vunpack.c.l.b16 %v240
  %v297 = vunpack.c.l.b16 %v241
  %v298 = vpack.c.b16 %v283, %v282
  %v299 = vpack.c.b16 %v285, %v284
  %v300 = vpack.c.b16 %v287, %v286
  %v301 = vpack.c.b16 %v289, %v288
  %v302 = vpack.c.b16 %v291, %v290
  %v303 = vpack.c.b16 %v293, %v292
  %v304 = vpack.c.b16 %v295, %v294
  %v305 = vpack.c.b16 %v297, %v296
  %314 = vmatprep.subr.bf16.mxu0 0
  %315 = vmatpush1.bf16.msra.mxu0 %v298
  %316 = vmatprep.subr.bf16.mxu0 0
  %317 = vmatpush1.bf16.msra.mxu0 %v299
  %318 = vmatprep.subr.bf16.mxu0 0
  %319 = vmatpush1.bf16.msra.mxu0 %v300
  %320 = vmatprep.subr.bf16.mxu0 0
  %321 = vmatpush1.bf16.msra.mxu0 %v301
  %322 = vmatprep.subr.bf16.mxu0 0
  %323 = vmatpush1.bf16.msra.mxu0 %v302
  %324 = vmatprep.subr.bf16.mxu0 0
  %325 = vmatpush1.bf16.msra.mxu0 %v303
  %326 = vmatprep.subr.bf16.mxu0 0
  %327 = vmatpush1.bf16.msra.mxu0 %v304
  %328 = vmatprep.subr.bf16.mxu0 0
  %329 = vmatpush1.bf16.msra.mxu0 %v305
  %330 = vmatprep.subr.bf16.mxu0 0
  %331 = vmatpush1.bf16.msra.mxu0 0
  %332 = vmatprep.subr.bf16.mxu0 0
  %333 = vmatpush1.bf16.msra.mxu0 0
  %334 = vmatprep.subr.bf16.mxu0 0
  %335 = vmatpush1.bf16.msra.mxu0 0
  %336 = vmatprep.subr.bf16.mxu0 0
  %337 = vmatpush1.bf16.msra.mxu0 0
  %338 = vmatprep.subr.bf16.mxu0 0
  %339 = vmatpush1.bf16.msra.mxu0 0
  %340 = vmatprep.subr.bf16.mxu0 0
  %341 = vmatpush1.bf16.msra.mxu0 0
  %342 = vmatprep.subr.bf16.mxu0 0
  %343 = vmatpush1.bf16.msra.mxu0 0
  %344 = vmatprep.subr.bf16.mxu0 0
  %345 = vmatpush1.bf16.msra.mxu0 0
  %346 = vmatprep.mubr.bf16.mxu0 0
  %347 = vmatmul.mubr.bf16.gmra.mrb[0].mxu0 %v242
  %v348 = vpop.f32.mrb[0].mxu0
  %v349 = vadd.f32 0.0, %v348
  %v350 = vpop.f32.mrb[0].mxu0
  %v351 = vpop.f32.mrb[0].mxu0
  %v352 = vadd.f32 0.0, %v351
  %v353 = vpop.f32.mrb[0].mxu0
  %354 = vmatprep.mubr.bf16.mxu0 0
  %355 = vmatmul.mubr.bf16.gmra.mrb[0].mxu0 %v243
  %v356 = vpop.f32.mrb[0].mxu0
  %v357 = vadd.f32 0.0, %v356
  %v358 = vpop.f32.mrb[0].mxu0
  %v359 = vpop.f32.mrb[0].mxu0
  %v360 = vadd.f32 0.0, %v359
  %v361 = vpop.f32.mrb[0].mxu0
  %362 = vmatprep.mubr.bf16.mxu0 0
  %363 = vmatmul.mubr.bf16.gmra.mrb[0].mxu0 %v244
  %v364 = vpop.f32.mrb[0].mxu0
  %v365 = vadd.f32 0.0, %v364
  %v366 = vpop.f32.mrb[0].mxu0
  %v367 = vpop.f32.mrb[0].mxu0
  %v368 = vadd.f32 0.0, %v367
  %v369 = vpop.f32.mrb[0].mxu0
  %370 = vmatprep.mubr.bf16.mxu0 0
  %371 = vmatmul.mubr.bf16.gmra.mrb[0].mxu0 %v245
  %v372 = vpop.f32.mrb[0].mxu0
  %v373 = vadd.f32 0.0, %v372
  %v374 = vpop.f32.mrb[0].mxu0
  %v375 = vpop.f32.mrb[0].mxu0
  %v376 = vadd.f32 0.0, %v375
  %v377 = vpop.f32.mrb[0].mxu0
  %378 = vmatprep.mubr.bf16.mxu0 0
  %379 = vmatmul.mubr.bf16.gmra.mrb[0].mxu0 %v246
  %v380 = vpop.f32.mrb[0].mxu0
  %v381 = vadd.f32 0.0, %v380
  %v382 = vpop.f32.mrb[0].mxu0
  %v383 = vpop.f32.mrb[0].mxu0
  %v384 = vadd.f32 0.0, %v383
  %v385 = vpop.f32.mrb[0].mxu0
  %386 = vmatprep.mubr.bf16.mxu0 0
  %387 = vmatmul.mubr.bf16.gmra.mrb[0].mxu0 %v247
  %v388 = vpop.f32.mrb[0].mxu0
  %v389 = vadd.f32 0.0, %v388
  %v390 = vpop.f32.mrb[0].mxu0
  %v391 = vpop.f32.mrb[0].mxu0
  %v392 = vadd.f32 0.0, %v391
  %v393 = vpop.f32.mrb[0].mxu0
  %394 = vmatprep.mubr.bf16.mxu0 0
  %395 = vmatmul.mubr.bf16.gmra.mrb[0].mxu0 %v248
  %v396 = vpop.f32.mrb[0].mxu0
  %v397 = vadd.f32 0.0, %v396
  %v398 = vpop.f32.mrb[0].mxu0
  %v399 = vpop.f32.mrb[0].mxu0
  %v400 = vadd.f32 0.0, %v399
  %v401 = vpop.f32.mrb[0].mxu0
  %402 = vmatprep.mubr.bf16.mxu0 0
  %403 = vmatmul.mubr.bf16.gmra.mrb[0].mxu0 %v249
  %v404 = vpop.f32.mrb[0].mxu0
  %v405 = vadd.f32 0.0, %v404
  %v406 = vpop.f32.mrb[0].mxu0
  %v407 = vpop.f32.mrb[0].mxu0
  %v408 = vadd.f32 0.0, %v407
  %v409 = vpop.f32.mrb[0].mxu0
  %410 = vmatprep.mubr.bf16.mxu0 0
  %411 = vmatmul.mubr.bf16.gmra.mrb[0].mxu0 %v250
  %v412 = vpop.f32.mrb[0].mxu0
  %v413 = vadd.f32 0.0, %v412
  %v414 = vpop.f32.mrb[0].mxu0
  %v415 = vpop.f32.mrb[0].mxu0
  %v416 = vadd.f32 0.0, %v415
  %v417 = vpop.f32.mrb[0].mxu0
  %418 = vmatprep.mubr.bf16.mxu0 0
  %419 = vmatmul.mubr.bf16.gmra.mrb[0].mxu0 %v251
  %v420 = vpop.f32.mrb[0].mxu0
  %v421 = vadd.f32 0.0, %v420
  %v422 = vpop.f32.mrb[0].mxu0
  %v423 = vpop.f32.mrb[0].mxu0
  %v424 = vadd.f32 0.0, %v423
  %v425 = vpop.f32.mrb[0].mxu0
  %426 = vmatprep.mubr.bf16.mxu0 0
  %427 = vmatmul.mubr.bf16.gmra.mrb[0].mxu0 %v252
  %v428 = vpop.f32.mrb[0].mxu0
  %v429 = vadd.f32 0.0, %v428
  %v430 = vpop.f32.mrb[0].mxu0
  %v431 = vpop.f32.mrb[0].mxu0
  %v432 = vadd.f32 0.0, %v431
  %v433 = vpop.f32.mrb[0].mxu0
  %434 = vmatprep.mubr.bf16.mxu0 0
  %435 = vmatmul.mubr.bf16.gmra.mrb[0].mxu0 %v253
  %v436 = vpop.f32.mrb[0].mxu0
  %v437 = vadd.f32 0.0, %v436
  %v438 = vpop.f32.mrb[0].mxu0
  %v439 = vpop.f32.mrb[0].mxu0
  %v440 = vadd.f32 0.0, %v439
  %v441 = vpop.f32.mrb[0].mxu0
  %442 = vdwg.mxu0
  %v443 = vpack.c.bf16 %v352, %v349
  %v444 = vpack.c.bf16 %v360, %v357
  %v445 = vpack.c.bf16 %v368, %v365
  %v446 = vpack.c.bf16 %v376, %v373
  %v447 = vpack.c.bf16 %v384, %v381
  %v448 = vpack.c.bf16 %v392, %v389
  %v449 = vpack.c.bf16 %v400, %v397
  %v450 = vpack.c.bf16 %v408, %v405
  %v451 = vpack.c.bf16 %v416, %v413
  %v452 = vpack.c.bf16 %v424, %v421
  %v453 = vpack.c.bf16 %v432, %v429
  %v454 = vpack.c.bf16 %v440, %v437
  %v467 = vunpack.c.l.b16 %v443
  %v468 = vunpack.c.h.b16 %v443
  %v469 = vunpack.c.l.b16 %v444
  %v470 = vunpack.c.h.b16 %v444
  %v471 = vunpack.c.l.b16 %v445
  %v472 = vunpack.c.h.b16 %v445
  %v473 = vunpack.c.l.b16 %v446
  %v474 = vunpack.c.h.b16 %v446
  %v475 = vunpack.c.l.b16 %v447
  %v476 = vunpack.c.h.b16 %v447
  %v477 = vunpack.c.l.b16 %v448
  %v478 = vunpack.c.h.b16 %v448
  %v479 = vunpack.c.l.b16 %v449
  %v480 = vunpack.c.h.b16 %v449
  %v481 = vunpack.c.l.b16 %v450
  %v482 = vunpack.c.h.b16 %v450
  %v483 = vunpack.c.l.b16 %v451
  %v484 = vunpack.c.h.b16 %v451
  %v485 = vunpack.c.l.b16 %v452
  %v486 = vunpack.c.h.b16 %v452
  %v487 = vunpack.c.l.b16 %v453
  %v488 = vunpack.c.h.b16 %v453
  %v489 = vunpack.c.l.b16 %v454
  %v490 = vunpack.c.h.b16 %v454
  %v491 = vpack.c.b16 %v467, %v467
  %v492 = vpack.c.b16 %v468, %v468
  %v493 = vpack.c.b16 %v469, %v469
  %v494 = vpack.c.b16 %v470, %v470
  %v495 = vpack.c.b16 %v471, %v471
  %v496 = vpack.c.b16 %v472, %v472
  %v497 = vpack.c.b16 %v473, %v473
  %v498 = vpack.c.b16 %v474, %v474
  %v499 = vpack.c.b16 %v475, %v475
  %v500 = vpack.c.b16 %v476, %v476
  %v501 = vpack.c.b16 %v477, %v477
  %v502 = vpack.c.b16 %v478, %v478
  %v503 = vpack.c.b16 %v479, %v479
  %v504 = vpack.c.b16 %v480, %v480
  %v505 = vpack.c.b16 %v481, %v481
  %v506 = vpack.c.b16 %v482, %v482
  %v507 = vpack.c.b16 %v483, %v483
  %v508 = vpack.c.b16 %v484, %v484
  %v509 = vpack.c.b16 %v485, %v485
  %v510 = vpack.c.b16 %v486, %v486
  %v511 = vpack.c.b16 %v487, %v487
  %v512 = vpack.c.b16 %v488, %v488
  %v513 = vpack.c.b16 %v489, %v489
  %v514 = vpack.c.b16 %v490, %v490
  %539 = vst [vmem:[#allocation2] sm:$0xf] %v491
  %540 = vst [vmem:[#allocation2 + $0x4] sm:$0xf] %v492
  %541 = vst [vmem:[#allocation2 + $0x8] sm:$0xf] %v493
  %542 = vst [vmem:[#allocation2 + $0xc] sm:$0xf] %v494
  %543 = vst [vmem:[#allocation2 + $0x10] sm:$0xf] %v495
  %544 = vst [vmem:[#allocation2 + $0x14] sm:$0xf] %v496
  %545 = vst [vmem:[#allocation2 + $0x18] sm:$0xf] %v497
  %546 = vst [vmem:[#allocation2 + $0x1c] sm:$0xf] %v498
  %547 = vst [vmem:[#allocation2 + $0x20] sm:$0xf] %v499
  %548 = vst [vmem:[#allocation2 + $0x24] sm:$0xf] %v500
  %549 = vst [vmem:[#allocation2 + $0x28] sm:$0xf] %v501
  %550 = vst [vmem:[#allocation2 + $0x2c] sm:$0xf] %v502
  %551 = vst [vmem:[#allocation2 + $0x30] sm:$0xf] %v503
  %552 = vst [vmem:[#allocation2 + $0x34] sm:$0xf] %v504
  %553 = vst [vmem:[#allocation2 + $0x38] sm:$0xf] %v505
  %554 = vst [vmem:[#allocation2 + $0x3c] sm:$0xf] %v506
  %555 = vst [vmem:[#allocation2 + $0x40] sm:$0xf] %v507
  %556 = vst [vmem:[#allocation2 + $0x44] sm:$0xf] %v508
  %557 = vst [vmem:[#allocation2 + $0x48] sm:$0xf] %v509
  %558 = vst [vmem:[#allocation2 + $0x4c] sm:$0xf] %v510
  %559 = vst [vmem:[#allocation2 + $0x50] sm:$0xf] %v511
  %560 = vst [vmem:[#allocation2 + $0x54] sm:$0xf] %v512
  %561 = vst [vmem:[#allocation2 + $0x58] sm:$0xf] %v513
  %562 = vst [vmem:[#allocation2 + $0x5c] sm:$0xf] %v514
  %563 = vst [vmem:[#allocation2 + $0x60] sm:$0xf] 0
  %v564 = vld [vmem:[#allocation2] sm:$0xf]
  %v565 = vld [vmem:[#allocation2 + $0x4] sm:$0xf]
  %v566 = vld [vmem:[#allocation2 + $0x8] sm:$0xf]
  %v567 = vld [vmem:[#allocation2 + $0xc] sm:$0xf]
  %v568 = vld [vmem:[#allocation2 + $0x10] sm:$0xf]
  %v569 = vld [vmem:[#allocation2 + $0x14] sm:$0xf]
  %v570 = vld [vmem:[#allocation2 + $0x18] sm:$0xf]
  %v571 = vld [vmem:[#allocation2 + $0x1c] sm:$0xf]
  %v572 = vld [vmem:[#allocation2 + $0x20] sm:$0xf]
  %v573 = vld [vmem:[#allocation2 + $0x24] sm:$0xf]
  %v574 = vld [vmem:[#allocation2 + $0x28] sm:$0xf]
  %v575 = vld [vmem:[#allocation2 + $0x2c] sm:$0xf]
  %v576 = vld [vmem:[#allocation2 + $0x30] sm:$0xf]
  %v577 = vld [vmem:[#allocation2 + $0x34] sm:$0xf]
  %v578 = vld [vmem:[#allocation2 + $0x38] sm:$0xf]
  %v579 = vld [vmem:[#allocation2 + $0x3c] sm:$0xf]
  %v580 = vld [vmem:[#allocation2 + $0x40] sm:$0xf]
  %v581 = vld [vmem:[#allocation2 + $0x44] sm:$0xf]
  %v582 = vld [vmem:[#allocation2 + $0x48] sm:$0xf]
  %v583 = vld [vmem:[#allocation2 + $0x4c] sm:$0xf]
  %v584 = vld [vmem:[#allocation2 + $0x50] sm:$0xf]
  %v585 = vld [vmem:[#allocation2 + $0x54] sm:$0xf]
  %v586 = vld [vmem:[#allocation2 + $0x58] sm:$0xf]
  %v587 = vld [vmem:[#allocation2 + $0x5c] sm:$0xf]
  %v612 = vunpack.c.l.b16 %v564
  %v613 = vunpack.c.l.b16 %v565
  %v614 = vunpack.c.l.b16 %v566
  %v615 = vunpack.c.l.b16 %v567
  %v616 = vunpack.c.l.b16 %v568
  %v617 = vunpack.c.l.b16 %v569
  %v618 = vunpack.c.l.b16 %v570
  %v619 = vunpack.c.l.b16 %v571
  %v620 = vunpack.c.l.b16 %v572
  %v621 = vunpack.c.l.b16 %v573
  %v622 = vunpack.c.l.b16 %v574
  %v623 = vunpack.c.l.b16 %v575
  %v624 = vunpack.c.l.b16 %v576
  %v625 = vunpack.c.l.b16 %v577
  %v626 = vunpack.c.l.b16 %v578
  %v627 = vunpack.c.l.b16 %v579
  %v628 = vunpack.c.l.b16 %v580
  %v629 = vunpack.c.l.b16 %v581
  %v630 = vunpack.c.l.b16 %v582
  %v631 = vunpack.c.l.b16 %v583
  %v632 = vunpack.c.l.b16 %v584
  %v633 = vunpack.c.l.b16 %v585
  %v634 = vunpack.c.l.b16 %v586
  %v635 = vunpack.c.l.b16 %v587
  %v636 = vpack.c.b16 %v613, %v612
  %v637 = vpack.c.b16 %v615, %v614
  %v638 = vpack.c.b16 %v617, %v616
  %v639 = vpack.c.b16 %v619, %v618
  %v640 = vpack.c.b16 %v621, %v620
  %v641 = vpack.c.b16 %v623, %v622
  %v642 = vpack.c.b16 %v625, %v624
  %v643 = vpack.c.b16 %v627, %v626
  %v644 = vpack.c.b16 %v629, %v628
  %v645 = vpack.c.b16 %v631, %v630
  %v646 = vpack.c.b16 %v633, %v632
  %v647 = vpack.c.b16 %v635, %v634
  %660 = vst [vmem:[#allocation3] sm:$0xff] %v636
  %661 = vst [vmem:[#allocation3 + $0x28] sm:$0xff] %v637
  %662 = vst [vmem:[#allocation3 + $0x50] sm:$0xff] %v638
  %663 = vst [vmem:[#allocation3 + $0x78] sm:$0xff] %v639
  %664 = vst [vmem:[#allocation3 + $0xa0] sm:$0xff] %v640
  %665 = vst [vmem:[#allocation3 + $0xc8] sm:$0xff] %v641
  %666 = vst [vmem:[#allocation3 + $0xf0] sm:$0xff] %v642
  %667 = vst [vmem:[#allocation3 + $0x118] sm:$0xff] %v643
  %668 = vst [vmem:[#allocation3 + $0x140] sm:$0xff] %v644
  %669 = vst [vmem:[#allocation3 + $0x168] sm:$0xff] %v645
  %670 = vst [vmem:[#allocation3 + $0x190] sm:$0xff] %v646
  %671 = vst [vmem:[#allocation3 + $0x1b8] sm:$0xff] %v647
  %v672 = vld [vmem:[#allocation2] sm:$0xf]
  %v673 = vld [vmem:[#allocation2 + $0x4] sm:$0xf]
  %v674 = vld [vmem:[#allocation2 + $0x8] sm:$0xf]
  %v675 = vld [vmem:[#allocation2 + $0xc] sm:$0xf]
  %v676 = vld [vmem:[#allocation2 + $0x10] sm:$0xf]
  %v677 = vld [vmem:[#allocation2 + $0x14] sm:$0xf]
  %v678 = vld [vmem:[#allocation2 + $0x18] sm:$0xf]
  %v679 = vld [vmem:[#allocation2 + $0x1c] sm:$0xf]
  %v680 = vld [vmem:[#allocation2 + $0x20] sm:$0xf]
  %v681 = vld [vmem:[#allocation2 + $0x24] sm:$0xf]
  %v682 = vld [vmem:[#allocation2 + $0x28] sm:$0xf]
  %v683 = vld [vmem:[#allocation2 + $0x2c] sm:$0xf]
  %v684 = vld [vmem:[#allocation2 + $0x30] sm:$0xf]
  %v685 = vld [vmem:[#allocation2 + $0x34] sm:$0xf]
  %v686 = vld [vmem:[#allocation2 + $0x38] sm:$0xf]
  %v687 = vld [vmem:[#allocation2 + $0x3c] sm:$0xf]
  %v688 = vld [vmem:[#allocation2 + $0x40] sm:$0xf]
  %v689 = vld [vmem:[#allocation2 + $0x44] sm:$0xf]
  %v690 = vld [vmem:[#allocation2 + $0x48] sm:$0xf]
  %v691 = vld [vmem:[#allocation2 + $0x4c] sm:$0xf]
  %v692 = vld [vmem:[#allocation2 + $0x50] sm:$0xf]
  %v693 = vld [vmem:[#allocation2 + $0x54] sm:$0xf]
  %v694 = vld [vmem:[#allocation2 + $0x58] sm:$0xf]
  %v695 = vld [vmem:[#allocation2 + $0x5c] sm:$0xf]
  %v696 = vld [vmem:[#allocation2 + $0x60] sm:$0x1]
  %v722 = vunpack.c.l.b16 %v672
  %v723 = vunpack.c.l.b16 %v673
  %v724 = vunpack.c.l.b16 %v674
  %v725 = vunpack.c.l.b16 %v675
  %v726 = vunpack.c.l.b16 %v676
  %v727 = vunpack.c.l.b16 %v677
  %v728 = vunpack.c.l.b16 %v678
  %v729 = vunpack.c.l.b16 %v679
  %v730 = vunpack.c.l.b16 %v680
  %v731 = vunpack.c.l.b16 %v681
  %v732 = vunpack.c.l.b16 %v682
  %v733 = vunpack.c.l.b16 %v683
  %v734 = vunpack.c.l.b16 %v684
  %v735 = vunpack.c.l.b16 %v685
  %v736 = vunpack.c.l.b16 %v686
  %v737 = vunpack.c.l.b16 %v687
  %v738 = vunpack.c.l.b16 %v688
  %v739 = vunpack.c.l.b16 %v689
  %v740 = vunpack.c.l.b16 %v690
  %v741 = vunpack.c.l.b16 %v691
  %v742 = vunpack.c.l.b16 %v692
  %v743 = vunpack.c.l.b16 %v693
  %v744 = vunpack.c.l.b16 %v694
  %v745 = vunpack.c.l.b16 %v695
  %v746 = vunpack.c.l.b16 %v696
  %v747 = vpack.c.b16 %v723, %v722
  %v748 = vpack.c.b16 %v725, %v724
  %v749 = vpack.c.b16 %v727, %v726
  %v750 = vpack.c.b16 %v729, %v728
  %v751 = vpack.c.b16 %v731, %v730
  %v752 = vpack.c.b16 %v733, %v732
  %v753 = vpack.c.b16 %v735, %v734
  %v754 = vpack.c.b16 %v737, %v736
  %v755 = vpack.c.b16 %v739, %v738
  %v756 = vpack.c.b16 %v741, %v740
  %v757 = vpack.c.b16 %v743, %v742
  %v758 = vpack.c.b16 %v745, %v744
  %v759 = vpack.c.b16 %v746, %v746
  %vm760 = vsmask.f32 7424
  %v762 = vshrl.u32 %v747, 16
  %v764 = vshll.u32 %v747, 16
  %v766 = vrot.slane %v764, 1
  %v767 = vor.u32 %v762, %v766
  %v769 = vshll.u32 %v748, 16
  %v771 = vrot.slane %v769, 1
  %v772 = vsel %vm760, %v767, %v771
  %v773 = vshrl.u32 %v748, 16
  %v775 = vor.u32 %v773, %v771
  %v777 = vshll.u32 %v749, 16
  %v779 = vrot.slane %v777, 1
  %v780 = vsel %vm760, %v775, %v779
  %v781 = vshrl.u32 %v749, 16
  %v783 = vor.u32 %v781, %v779
  %v785 = vshll.u32 %v750, 16
  %v787 = vrot.slane %v785, 1
  %v788 = vsel %vm760, %v783, %v787
  %v789 = vshrl.u32 %v750, 16
  %v791 = vor.u32 %v789, %v787
  %v793 = vshll.u32 %v751, 16
  %v795 = vrot.slane %v793, 1
  %v796 = vsel %vm760, %v791, %v795
  %v797 = vshrl.u32 %v751, 16
  %v799 = vor.u32 %v797, %v795
  %v801 = vshll.u32 %v752, 16
  %v803 = vrot.slane %v801, 1
  %v804 = vsel %vm760, %v799, %v803
  %v805 = vshrl.u32 %v752, 16
  %v807 = vor.u32 %v805, %v803
  %v809 = vshll.u32 %v753, 16
  %v811 = vrot.slane %v809, 1
  %v812 = vsel %vm760, %v807, %v811
  %v813 = vshrl.u32 %v753, 16
  %v815 = vor.u32 %v813, %v811
  %v817 = vshll.u32 %v754, 16
  %v819 = vrot.slane %v817, 1
  %v820 = vsel %vm760, %v815, %v819
  %v821 = vshrl.u32 %v754, 16
  %v823 = vor.u32 %v821, %v819
  %v825 = vshll.u32 %v755, 16
  %v827 = vrot.slane %v825, 1
  %v828 = vsel %vm760, %v823, %v827
  %v829 = vshrl.u32 %v755, 16
  %v831 = vor.u32 %v829, %v827
  %v833 = vshll.u32 %v756, 16
  %v835 = vrot.slane %v833, 1
  %v836 = vsel %vm760, %v831, %v835
  %v837 = vshrl.u32 %v756, 16
  %v839 = vor.u32 %v837, %v835
  %v841 = vshll.u32 %v757, 16
  %v843 = vrot.slane %v841, 1
  %v844 = vsel %vm760, %v839, %v843
  %v845 = vshrl.u32 %v757, 16
  %v847 = vor.u32 %v845, %v843
  %v849 = vshll.u32 %v758, 16
  %v851 = vrot.slane %v849, 1
  %v852 = vsel %vm760, %v847, %v851
  %v853 = vshrl.u32 %v758, 16
  %v855 = vor.u32 %v853, %v851
  %v857 = vshll.u32 %v759, 16
  %v859 = vrot.slane %v857, 1
  %v860 = vsel %vm760, %v855, %v859
  %873 = vst [vmem:[#allocation3 + $0x8] sm:$0xff] %v772
  %874 = vst [vmem:[#allocation3 + $0x30] sm:$0xff] %v780
  %875 = vst [vmem:[#allocation3 + $0x58] sm:$0xff] %v788
  %876 = vst [vmem:[#allocation3 + $0x80] sm:$0xff] %v796
  %877 = vst [vmem:[#allocation3 + $0xa8] sm:$0xff] %v804
  %878 = vst [vmem:[#allocation3 + $0xd0] sm:$0xff] %v812
  %879 = vst [vmem:[#allocation3 + $0xf8] sm:$0xff] %v820
  %880 = vst [vmem:[#allocation3 + $0x120] sm:$0xff] %v828
  %881 = vst [vmem:[#allocation3 + $0x148] sm:$0xff] %v836
  %882 = vst [vmem:[#allocation3 + $0x170] sm:$0xff] %v844
  %883 = vst [vmem:[#allocation3 + $0x198] sm:$0xff] %v852
  %884 = vst [vmem:[#allocation3 + $0x1c0] sm:$0xff] %v860
  %v885 = vld [vmem:[#allocation2] sm:$0xe]
  %v886 = vld [vmem:[#allocation2 + $0x4] sm:$0xf]
  %v887 = vld [vmem:[#allocation2 + $0x8] sm:$0xf]
  %v888 = vld [vmem:[#allocation2 + $0xc] sm:$0xf]
  %v889 = vld [vmem:[#allocation2 + $0x10] sm:$0xf]
  %v890 = vld [vmem:[#allocation2 + $0x14] sm:$0xf]
  %v891 = vld [vmem:[#allocation2 + $0x18] sm:$0xf]
  %v892 = vld [vmem:[#allocation2 + $0x1c] sm:$0xf]
  %v893 = vld [vmem:[#allocation2 + $0x20] sm:$0xf]
  %v894 = vld [vmem:[#allocation2 + $0x24] sm:$0xf]
  %v895 = vld [vmem:[#allocation2 + $0x28] sm:$0xf]
  %v896 = vld [vmem:[#allocation2 + $0x2c] sm:$0xf]
  %v897 = vld [vmem:[#allocation2 + $0x30] sm:$0xf]
  %v898 = vld [vmem:[#allocation2 + $0x34] sm:$0xf]
  %v899 = vld [vmem:[#allocation2 + $0x38] sm:$0xf]
  %v900 = vld [vmem:[#allocation2 + $0x3c] sm:$0xf]
  %v901 = vld [vmem:[#allocation2 + $0x40] sm:$0xf]
  %v902 = vld [vmem:[#allocation2 + $0x44] sm:$0xf]
  %v903 = vld [vmem:[#allocation2 + $0x48] sm:$0xf]
  %v904 = vld [vmem:[#allocation2 + $0x4c] sm:$0xf]
  %v905 = vld [vmem:[#allocation2 + $0x50] sm:$0xf]
  %v906 = vld [vmem:[#allocation2 + $0x54] sm:$0xf]
  %v907 = vld [vmem:[#allocation2 + $0x58] sm:$0xf]
  %v908 = vld [vmem:[#allocation2 + $0x5c] sm:$0xf]
  %v909 = vld [vmem:[#allocation2 + $0x60] sm:$0x1]
  %v935 = vunpack.c.l.b16 %v885
  %v936 = vunpack.c.l.b16 %v886
  %v937 = vunpack.c.l.b16 %v887
  %v938 = vunpack.c.l.b16 %v888
  %v939 = vunpack.c.l.b16 %v889
  %v940 = vunpack.c.l.b16 %v890
  %v941 = vunpack.c.l.b16 %v891
  %v942 = vunpack.c.l.b16 %v892
  %v943 = vunpack.c.l.b16 %v893
  %v944 = vunpack.c.l.b16 %v894
  %v945 = vunpack.c.l.b16 %v895
  %v946 = vunpack.c.l.b16 %v896
  %v947 = vunpack.c.l.b16 %v897
  %v948 = vunpack.c.l.b16 %v898
  %v949 = vunpack.c.l.b16 %v899
  %v950 = vunpack.c.l.b16 %v900
  %v951 = vunpack.c.l.b16 %v901
  %v952 = vunpack.c.l.b16 %v902
  %v953 = vunpack.c.l.b16 %v903
  %v954 = vunpack.c.l.b16 %v904
  %v955 = vunpack.c.l.b16 %v905
  %v956 = vunpack.c.l.b16 %v906
  %v957 = vunpack.c.l.b16 %v907
  %v958 = vunpack.c.l.b16 %v908
  %v959 = vunpack.c.l.b16 %v909
  %v960 = vpack.c.b16 %v936, %v935
  %v961 = vpack.c.b16 %v938, %v937
  %v962 = vpack.c.b16 %v940, %v939
  %v963 = vpack.c.b16 %v942, %v941
  %v964 = vpack.c.b16 %v944, %v943
  %v965 = vpack.c.b16 %v946, %v945
  %v966 = vpack.c.b16 %v948, %v947
  %v967 = vpack.c.b16 %v950, %v949
  %v968 = vpack.c.b16 %v952, %v951
  %v969 = vpack.c.b16 %v954, %v953
  %v970 = vpack.c.b16 %v956, %v955
  %v971 = vpack.c.b16 %v958, %v957
  %v972 = vpack.c.b16 %v959, %v959
  %vm973 = vcmask 1046528
  %v974 = vrot.slane %v960, 1
  %v975 = vrot.slane %v961, 1
  %v976 = vsel %vm973, %v974, %v975
  %v977 = vrot.slane %v962, 1
  %v978 = vsel %vm973, %v975, %v977
  %v979 = vrot.slane %v963, 1
  %v980 = vsel %vm973, %v977, %v979
  %v981 = vrot.slane %v964, 1
  %v982 = vsel %vm973, %v979, %v981
  %v983 = vrot.slane %v965, 1
  %v984 = vsel %vm973, %v981, %v983
  %v985 = vrot.slane %v966, 1
  %v986 = vsel %vm973, %v983, %v985
  %v987 = vrot.slane %v967, 1
  %v988 = vsel %vm973, %v985, %v987
  %v989 = vrot.slane %v968, 1
  %v990 = vsel %vm973, %v987, %v989
  %v991 = vrot.slane %v969, 1
  %v992 = vsel %vm973, %v989, %v991
  %v993 = vrot.slane %v970, 1
  %v994 = vsel %vm973, %v991, %v993
  %v995 = vrot.slane %v971, 1
  %v996 = vsel %vm973, %v993, %v995
  %v997 = vrot.slane %v972, 1
  %v998 = vsel %vm973, %v995, %v997
  %1011 = vst [vmem:[#allocation3 + $0x10] sm:$0xff] %v976
  %1012 = vst [vmem:[#allocation3 + $0x38] sm:$0xff] %v978
  %1013 = vst [vmem:[#allocation3 + $0x60] sm:$0xff] %v980
  %1014 = vst [vmem:[#allocation3 + $0x88] sm:$0xff] %v982
  %1015 = vst [vmem:[#allocation3 + $0xb0] sm:$0xff] %v984
  %1016 = vst [vmem:[#allocation3 + $0xd8] sm:$0xff] %v986
  %1017 = vst [vmem:[#allocation3 + $0x100] sm:$0xff] %v988
  %1018 = vst [vmem:[#allocation3 + $0x128] sm:$0xff] %v990
  %1019 = vst [vmem:[#allocation3 + $0x150] sm:$0xff] %v992
  %1020 = vst [vmem:[#allocation3 + $0x178] sm:$0xff] %v994
  %1021 = vst [vmem:[#allocation3 + $0x1a0] sm:$0xff] %v996
  %1022 = vst [vmem:[#allocation3 + $0x1c8] sm:$0xff] %v998
  %v1023 = vld [vmem:[#allocation2] sm:$0xe]
  %v1024 = vld [vmem:[#allocation2 + $0x4] sm:$0xf]
  %v1025 = vld [vmem:[#allocation2 + $0x8] sm:$0xf]
  %v1026 = vld [vmem:[#allocation2 + $0xc] sm:$0xf]
  %v1027 = vld [vmem:[#allocation2 + $0x10] sm:$0xf]
  %v1028 = vld [vmem:[#allocation2 + $0x14] sm:$0xf]
  %v1029 = vld [vmem:[#allocation2 + $0x18] sm:$0xf]
  %v1030 = vld [vmem:[#allocation2 + $0x1c] sm:$0xf]
  %v1031 = vld [vmem:[#allocation2 + $0x20] sm:$0xf]
  %v1032 = vld [vmem:[#allocation2 + $0x24] sm:$0xf]
  %v1033 = vld [vmem:[#allocation2 + $0x28] sm:$0xf]
  %v1034 = vld [vmem:[#allocation2 + $0x2c] sm:$0xf]
  %v1035 = vld [vmem:[#allocation2 + $0x30] sm:$0xf]
  %v1036 = vld [vmem:[#allocation2 + $0x34] sm:$0xf]
  %v1037 = vld [vmem:[#allocation2 + $0x38] sm:$0xf]
  %v1038 = vld [vmem:[#allocation2 + $0x3c] sm:$0xf]
  %v1039 = vld [vmem:[#allocation2 + $0x40] sm:$0xf]
  %v1040 = vld [vmem:[#allocation2 + $0x44] sm:$0xf]
  %v1041 = vld [vmem:[#allocation2 + $0x48] sm:$0xf]
  %v1042 = vld [vmem:[#allocation2 + $0x4c] sm:$0xf]
  %v1043 = vld [vmem:[#allocation2 + $0x50] sm:$0xf]
  %v1044 = vld [vmem:[#allocation2 + $0x54] sm:$0xf]
  %v1045 = vld [vmem:[#allocation2 + $0x58] sm:$0xf]
  %v1046 = vld [vmem:[#allocation2 + $0x5c] sm:$0xf]
  %v1047 = vld [vmem:[#allocation2 + $0x60] sm:$0x3]
  %v1073 = vunpack.c.l.b16 %v1023
  %v1074 = vunpack.c.l.b16 %v1024
  %v1075 = vunpack.c.l.b16 %v1025
  %v1076 = vunpack.c.l.b16 %v1026
  %v1077 = vunpack.c.l.b16 %v1027
  %v1078 = vunpack.c.l.b16 %v1028
  %v1079 = vunpack.c.l.b16 %v1029
  %v1080 = vunpack.c.l.b16 %v1030
  %v1081 = vunpack.c.l.b16 %v1031
  %v1082 = vunpack.c.l.b16 %v1032
  %v1083 = vunpack.c.l.b16 %v1033
  %v1084 = vunpack.c.l.b16 %v1034
  %v1085 = vunpack.c.l.b16 %v1035
  %v1086 = vunpack.c.l.b16 %v1036
  %v1087 = vunpack.c.l.b16 %v1037
  %v1088 = vunpack.c.l.b16 %v1038
  %v1089 = vunpack.c.l.b16 %v1039
  %v1090 = vunpack.c.l.b16 %v1040
  %v1091 = vunpack.c.l.b16 %v1041
  %v1092 = vunpack.c.l.b16 %v1042
  %v1093 = vunpack.c.l.b16 %v1043
  %v1094 = vunpack.c.l.b16 %v1044
  %v1095 = vunpack.c.l.b16 %v1045
  %v1096 = vunpack.c.l.b16 %v1046
  %v1097 = vunpack.c.l.b16 %v1047
  %v1098 = vpack.c.b16 %v1074, %v1073
  %v1099 = vpack.c.b16 %v1076, %v1075
  %v1100 = vpack.c.b16 %v1078, %v1077
  %v1101 = vpack.c.b16 %v1080, %v1079
  %v1102 = vpack.c.b16 %v1082, %v1081
  %v1103 = vpack.c.b16 %v1084, %v1083
  %v1104 = vpack.c.b16 %v1086, %v1085
  %v1105 = vpack.c.b16 %v1088, %v1087
  %v1106 = vpack.c.b16 %v1090, %v1089
  %v1107 = vpack.c.b16 %v1092, %v1091
  %v1108 = vpack.c.b16 %v1094, %v1093
  %v1109 = vpack.c.b16 %v1096, %v1095
  %v1110 = vpack.c.b16 %v1097, %v1097
  %vm1111 = vsmask.f32 6400
  %v1113 = vshrl.u32 %v1098, 16
  %v1115 = vrot.slane %v1113, 1
  %v1116 = vshll.u32 %v1098, 16
  %v1118 = vrot.slane %v1116, 2
  %v1119 = vor.u32 %v1115, %v1118
  %v1121 = vshrl.u32 %v1099, 16
  %v1123 = vrot.slane %v1121, 1
  %v1124 = vshll.u32 %v1099, 16
  %v1126 = vrot.slane %v1124, 2
  %v1127 = vor.u32 %v1123, %v1126
  %v1128 = vsel %vm1111, %v1119, %v1127
  %v1130 = vshrl.u32 %v1100, 16
  %v1132 = vrot.slane %v1130, 1
  %v1133 = vshll.u32 %v1100, 16
  %v1135 = vrot.slane %v1133, 2
  %v1136 = vor.u32 %v1132, %v1135
  %v1137 = vsel %vm1111, %v1127, %v1136
  %v1139 = vshrl.u32 %v1101, 16
  %v1141 = vrot.slane %v1139, 1
  %v1142 = vshll.u32 %v1101, 16
  %v1144 = vrot.slane %v1142, 2
  %v1145 = vor.u32 %v1141, %v1144
  %v1146 = vsel %vm1111, %v1136, %v1145
  %v1148 = vshrl.u32 %v1102, 16
  %v1150 = vrot.slane %v1148, 1
  %v1151 = vshll.u32 %v1102, 16
  %v1153 = vrot.slane %v1151, 2
  %v1154 = vor.u32 %v1150, %v1153
  %v1155 = vsel %vm1111, %v1145, %v1154
  %v1157 = vshrl.u32 %v1103, 16
  %v1159 = vrot.slane %v1157, 1
  %v1160 = vshll.u32 %v1103, 16
  %v1162 = vrot.slane %v1160, 2
  %v1163 = vor.u32 %v1159, %v1162
  %v1164 = vsel %vm1111, %v1154, %v1163
  %v1166 = vshrl.u32 %v1104, 16
  %v1168 = vrot.slane %v1166, 1
  %v1169 = vshll.u32 %v1104, 16
  %v1171 = vrot.slane %v1169, 2
  %v1172 = vor.u32 %v1168, %v1171
  %v1173 = vsel %vm1111, %v1163, %v1172
  %v1175 = vshrl.u32 %v1105, 16
  %v1177 = vrot.slane %v1175, 1
  %v1178 = vshll.u32 %v1105, 16
  %v1180 = vrot.slane %v1178, 2
  %v1181 = vor.u32 %v1177, %v1180
  %v1182 = vsel %vm1111, %v1172, %v1181
  %v1184 = vshrl.u32 %v1106, 16
  %v1186 = vrot.slane %v1184, 1
  %v1187 = vshll.u32 %v1106, 16
  %v1189 = vrot.slane %v1187, 2
  %v1190 = vor.u32 %v1186, %v1189
  %v1191 = vsel %vm1111, %v1181, %v1190
  %v1193 = vshrl.u32 %v1107, 16
  %v1195 = vrot.slane %v1193, 1
  %v1196 = vshll.u32 %v1107, 16
  %v1198 = vrot.slane %v1196, 2
  %v1199 = vor.u32 %v1195, %v1198
  %v1200 = vsel %vm1111, %v1190, %v1199
  %v1202 = vshrl.u32 %v1108, 16
  %v1204 = vrot.slane %v1202, 1
  %v1205 = vshll.u32 %v1108, 16
  %v1207 = vrot.slane %v1205, 2
  %v1208 = vor.u32 %v1204, %v1207
  %v1209 = vsel %vm1111, %v1199, %v1208
  %v1211 = vshrl.u32 %v1109, 16
  %v1213 = vrot.slane %v1211, 1
  %v1214 = vshll.u32 %v1109, 16
  %v1216 = vrot.slane %v1214, 2
  %v1217 = vor.u32 %v1213, %v1216
  %v1218 = vsel %vm1111, %v1208, %v1217
  %v1220 = vshrl.u32 %v1110, 16
  %v1222 = vrot.slane %v1220, 1
  %v1223 = vshll.u32 %v1110, 16
  %v1225 = vrot.slane %v1223, 2
  %v1226 = vor.u32 %v1222, %v1225
  %v1227 = vsel %vm1111, %v1217, %v1226
  %1240 = vst [vmem:[#allocation3 + $0x18] sm:$0xff] %v1128
  %1241 = vst [vmem:[#allocation3 + $0x40] sm:$0xff] %v1137
  %1242 = vst [vmem:[#allocation3 + $0x68] sm:$0xff] %v1146
  %1243 = vst [vmem:[#allocation3 + $0x90] sm:$0xff] %v1155
  %1244 = vst [vmem:[#allocation3 + $0xb8] sm:$0xff] %v1164
  %1245 = vst [vmem:[#allocation3 + $0xe0] sm:$0xff] %v1173
  %1246 = vst [vmem:[#allocation3 + $0x108] sm:$0xff] %v1182
  %1247 = vst [vmem:[#allocation3 + $0x130] sm:$0xff] %v1191
  %1248 = vst [vmem:[#allocation3 + $0x158] sm:$0xff] %v1200
  %1249 = vst [vmem:[#allocation3 + $0x180] sm:$0xff] %v1209
  %1250 = vst [vmem:[#allocation3 + $0x1a8] sm:$0xff] %v1218
  %1251 = vst [vmem:[#allocation3 + $0x1d0] sm:$0xff] %v1227
  %v1252 = vld [vmem:[#allocation2] sm:$0xc]
  %v1253 = vld [vmem:[#allocation2 + $0x4] sm:$0xf]
  %v1254 = vld [vmem:[#allocation2 + $0x8] sm:$0xf]
  %v1255 = vld [vmem:[#allocation2 + $0xc] sm:$0xf]
  %v1256 = vld [vmem:[#allocation2 + $0x10] sm:$0xf]
  %v1257 = vld [vmem:[#allocation2 + $0x14] sm:$0xf]
  %v1258 = vld [vmem:[#allocation2 + $0x18] sm:$0xf]
  %v1259 = vld [vmem:[#allocation2 + $0x1c] sm:$0xf]
  %v1260 = vld [vmem:[#allocation2 + $0x20] sm:$0xf]
  %v1261 = vld [vmem:[#allocation2 + $0x24] sm:$0xf]
  %v1262 = vld [vmem:[#allocation2 + $0x28] sm:$0xf]
  %v1263 = vld [vmem:[#allocation2 + $0x2c] sm:$0xf]
  %v1264 = vld [vmem:[#allocation2 + $0x30] sm:$0xf]
  %v1265 = vld [vmem:[#allocation2 + $0x34] sm:$0xf]
  %v1266 = vld [vmem:[#allocation2 + $0x38] sm:$0xf]
  %v1267 = vld [vmem:[#allocation2 + $0x3c] sm:$0xf]
  %v1268 = vld [vmem:[#allocation2 + $0x40] sm:$0xf]
  %v1269 = vld [vmem:[#allocation2 + $0x44] sm:$0xf]
  %v1270 = vld [vmem:[#allocation2 + $0x48] sm:$0xf]
  %v1271 = vld [vmem:[#allocation2 + $0x4c] sm:$0xf]
  %v1272 = vld [vmem:[#allocation2 + $0x50] sm:$0xf]
  %v1273 = vld [vmem:[#allocation2 + $0x54] sm:$0xf]
  %v1274 = vld [vmem:[#allocation2 + $0x58] sm:$0xf]
  %v1275 = vld [vmem:[#allocation2 + $0x5c] sm:$0xf]
  %v1276 = vld [vmem:[#allocation2 + $0x60] sm:$0x3]
  %v1302 = vunpack.c.l.b16 %v1252
  %v1303 = vunpack.c.l.b16 %v1253
  %v1304 = vunpack.c.l.b16 %v1254
  %v1305 = vunpack.c.l.b16 %v1255
  %v1306 = vunpack.c.l.b16 %v1256
  %v1307 = vunpack.c.l.b16 %v1257
  %v1308 = vunpack.c.l.b16 %v1258
  %v1309 = vunpack.c.l.b16 %v1259
  %v1310 = vunpack.c.l.b16 %v1260
  %v1311 = vunpack.c.l.b16 %v1261
  %v1312 = vunpack.c.l.b16 %v1262
  %v1313 = vunpack.c.l.b16 %v1263
  %v1314 = vunpack.c.l.b16 %v1264
  %v1315 = vunpack.c.l.b16 %v1265
  %v1316 = vunpack.c.l.b16 %v1266
  %v1317 = vunpack.c.l.b16 %v1267
  %v1318 = vunpack.c.l.b16 %v1268
  %v1319 = vunpack.c.l.b16 %v1269
  %v1320 = vunpack.c.l.b16 %v1270
  %v1321 = vunpack.c.l.b16 %v1271
  %v1322 = vunpack.c.l.b16 %v1272
  %v1323 = vunpack.c.l.b16 %v1273
  %v1324 = vunpack.c.l.b16 %v1274
  %v1325 = vunpack.c.l.b16 %v1275
  %v1326 = vunpack.c.l.b16 %v1276
  %v1327 = vpack.c.b16 %v1303, %v1302
  %v1328 = vpack.c.b16 %v1305, %v1304
  %v1329 = vpack.c.b16 %v1307, %v1306
  %v1330 = vpack.c.b16 %v1309, %v1308
  %v1331 = vpack.c.b16 %v1311, %v1310
  %v1332 = vpack.c.b16 %v1313, %v1312
  %v1333 = vpack.c.b16 %v1315, %v1314
  %v1334 = vpack.c.b16 %v1317, %v1316
  %v1335 = vpack.c.b16 %v1319, %v1318
  %v1336 = vpack.c.b16 %v1321, %v1320
  %v1337 = vpack.c.b16 %v1323, %v1322
  %v1338 = vpack.c.b16 %v1325, %v1324
  %v1339 = vpack.c.b16 %v1326, %v1326
  %vm1340 = vcmask 1045504
  %v1341 = vrot.slane %v1327, 2
  %v1342 = vrot.slane %v1328, 2
  %v1343 = vsel %vm1340, %v1341, %v1342
  %v1344 = vrot.slane %v1329, 2
  %v1345 = vsel %vm1340, %v1342, %v1344
  %v1346 = vrot.slane %v1330, 2
  %v1347 = vsel %vm1340, %v1344, %v1346
  %v1348 = vrot.slane %v1331, 2
  %v1349 = vsel %vm1340, %v1346, %v1348
  %v1350 = vrot.slane %v1332, 2
  %v1351 = vsel %vm1340, %v1348, %v1350
  %v1352 = vrot.slane %v1333, 2
  %v1353 = vsel %vm1340, %v1350, %v1352
  %v1354 = vrot.slane %v1334, 2
  %v1355 = vsel %vm1340, %v1352, %v1354
  %v1356 = vrot.slane %v1335, 2
  %v1357 = vsel %vm1340, %v1354, %v1356
  %v1358 = vrot.slane %v1336, 2
  %v1359 = vsel %vm1340, %v1356, %v1358
  %v1360 = vrot.slane %v1337, 2
  %v1361 = vsel %vm1340, %v1358, %v1360
  %v1362 = vrot.slane %v1338, 2
  %v1363 = vsel %vm1340, %v1360, %v1362
  %v1364 = vrot.slane %v1339, 2
  %v1365 = vsel %vm1340, %v1362, %v1364
  %1378 = vst [vmem:[#allocation3 + $0x20] sm:$0xff] %v1343
  %1379 = vst [vmem:[#allocation3 + $0x48] sm:$0xff] %v1345
  %1380 = vst [vmem:[#allocation3 + $0x70] sm:$0xff] %v1347
  %1381 = vst [vmem:[#allocation3 + $0x98] sm:$0xff] %v1349
  %1382 = vst [vmem:[#allocation3 + $0xc0] sm:$0xff] %v1351
  %1383 = vst [vmem:[#allocation3 + $0xe8] sm:$0xff] %v1353
  %1384 = vst [vmem:[#allocation3 + $0x110] sm:$0xff] %v1355
  %1385 = vst [vmem:[#allocation3 + $0x138] sm:$0xff] %v1357
  %1386 = vst [vmem:[#allocation3 + $0x160] sm:$0xff] %v1359
  %1387 = vst [vmem:[#allocation3 + $0x188] sm:$0xff] %v1361
  %1388 = vst [vmem:[#allocation3 + $0x1b0] sm:$0xff] %v1363
  %1389 = vst [vmem:[#allocation3 + $0x1d8] sm:$0xff] %v1365
  %v1390 = vld [vmem:[#allocation3] sm:$0xff]
  %v1391 = vld [vmem:[#allocation3 + $0x8] sm:$0xff]
  %v1392 = vld [vmem:[#allocation3 + $0x10] sm:$0xff]
  %v1393 = vld [vmem:[#allocation3 + $0x18] sm:$0xff]
  %v1394 = vld [vmem:[#allocation3 + $0x20] sm:$0xff]
  %v1395 = vld [vmem:[#allocation3 + $0x28] sm:$0xff]
  %v1396 = vld [vmem:[#allocation3 + $0x30] sm:$0xff]
  %v1397 = vld [vmem:[#allocation3 + $0x38] sm:$0xff]
  %v1398 = vld [vmem:[#allocation3 + $0x40] sm:$0xff]
  %v1399 = vld [vmem:[#allocation3 + $0x48] sm:$0xff]
  %v1400 = vld [vmem:[#allocation3 + $0x50] sm:$0xff]
  %v1401 = vld [vmem:[#allocation3 + $0x58] sm:$0xff]
  %v1402 = vld [vmem:[#allocation3 + $0x60] sm:$0xff]
  %v1403 = vld [vmem:[#allocation3 + $0x68] sm:$0xff]
  %v1404 = vld [vmem:[#allocation3 + $0x70] sm:$0xff]
  %v1405 = vld [vmem:[#allocation3 + $0x78] sm:$0xff]
  %v1406 = vld [vmem:[#allocation3 + $0x80] sm:$0xff]
  %v1407 = vld [vmem:[#allocation3 + $0x88] sm:$0xff]
  %v1408 = vld [vmem:[#allocation3 + $0x90] sm:$0xff]
  %v1409 = vld [vmem:[#allocation3 + $0x98] sm:$0xff]
  %v1410 = vld [vmem:[#allocation3 + $0xa0] sm:$0xff]
  %v1411 = vld [vmem:[#allocation3 + $0xa8] sm:$0xff]
  %v1412 = vld [vmem:[#allocation3 + $0xb0] sm:$0xff]
  %v1413 = vld [vmem:[#allocation3 + $0xb8] sm:$0xff]
  %v1414 = vld [vmem:[#allocation3 + $0xc0] sm:$0xff]
  %v1415 = vld [vmem:[#allocation3 + $0xc8] sm:$0xff]
  %v1416 = vld [vmem:[#allocation3 + $0xd0] sm:$0xff]
  %v1417 = vld [vmem:[#allocation3 + $0xd8] sm:$0xff]
  %v1418 = vld [vmem:[#allocation3 + $0xe0] sm:$0xff]
  %v1419 = vld [vmem:[#allocation3 + $0xe8] sm:$0xff]
  %v1420 = vld [vmem:[#allocation3 + $0xf0] sm:$0xff]
  %v1421 = vld [vmem:[#allocation3 + $0xf8] sm:$0xff]
  %v1422 = vld [vmem:[#allocation3 + $0x100] sm:$0xff]
  %v1423 = vld [vmem:[#allocation3 + $0x108] sm:$0xff]
  %v1424 = vld [vmem:[#allocation3 + $0x110] sm:$0xff]
  %v1425 = vld [vmem:[#allocation3 + $0x118] sm:$0xff]
  %v1426 = vld [vmem:[#allocation3 + $0x120] sm:$0xff]
  %v1427 = vld [vmem:[#allocation3 + $0x128] sm:$0xff]
  %v1428 = vld [vmem:[#allocation3 + $0x130] sm:$0xff]
  %v1429 = vld [vmem:[#allocation3 + $0x138] sm:$0xff]
  %v1430 = vld [vmem:[#allocation3 + $0x140] sm:$0xff]
  %v1431 = vld [vmem:[#allocation3 + $0x148] sm:$0xff]
  %v1432 = vld [vmem:[#allocation3 + $0x150] sm:$0xff]
  %v1433 = vld [vmem:[#allocation3 + $0x158] sm:$0xff]
  %v1434 = vld [vmem:[#allocation3 + $0x160] sm:$0xff]
  %v1435 = vld [vmem:[#allocation3 + $0x168] sm:$0xff]
  %v1436 = vld [vmem:[#allocation3 + $0x170] sm:$0xff]
  %v1437 = vld [vmem:[#allocation3 + $0x178] sm:$0xff]
  %v1438 = vld [vmem:[#allocation3 + $0x180] sm:$0xff]
  %v1439 = vld [vmem:[#allocation3 + $0x188] sm:$0xff]
  %v1440 = vld [vmem:[#allocation3 + $0x190] sm:$0xff]
  %v1441 = vld [vmem:[#allocation3 + $0x198] sm:$0xff]
  %v1442 = vld [vmem:[#allocation3 + $0x1a0] sm:$0xff]
  %v1443 = vld [vmem:[#allocation3 + $0x1a8] sm:$0xff]
  %v1444 = vld [vmem:[#allocation3 + $0x1b0] sm:$0xff]
  %v1445 = vld [vmem:[#allocation3 + $0x1b8] sm:$0xff]
  %v1446 = vld [vmem:[#allocation3 + $0x1c0] sm:$0xff]
  %v1447 = vld [vmem:[#allocation3 + $0x1c8] sm:$0xff]
  %v1448 = vld [vmem:[#allocation3 + $0x1d0] sm:$0xff]
  %v1449 = vld [vmem:[#allocation3 + $0x1d8] sm:$0xff]
  %v1450 = vld [vmem:[%s2] sm:$0xf]
  %v1451 = vld [vmem:[%s2 + $0x4] sm:$0xf]
  %v1452 = vld [vmem:[%s2 + $0x8] sm:$0xf]
  %v1453 = vld [vmem:[%s2 + $0xc] sm:$0xf]
  %v1454 = vld [vmem:[%s2 + $0x10] sm:$0xf]
  %v1455 = vld [vmem:[%s2 + $0x14] sm:$0xf]
  %v1456 = vld [vmem:[%s2 + $0x18] sm:$0xf]
  %v1457 = vld [vmem:[%s2 + $0x1c] sm:$0xf]
  %v1458 = vld [vmem:[%s2 + $0x20] sm:$0xf]
  %v1459 = vld [vmem:[%s2 + $0x24] sm:$0xf]
  %v1460 = vld [vmem:[%s2 + $0x28] sm:$0xf]
  %v1461 = vld [vmem:[%s2 + $0x2c] sm:$0xf]
  %v1462 = vld [vmem:[%s2 + $0x30] sm:$0xf]
  %v1463 = vld [vmem:[%s2 + $0x34] sm:$0xf]
  %v1464 = vld [vmem:[%s2 + $0x38] sm:$0xf]
  %v1465 = vld [vmem:[%s2 + $0x3c] sm:$0xf]
  %v1466 = vld [vmem:[%s2 + $0x40] sm:$0xf]
  %v1467 = vld [vmem:[%s2 + $0x44] sm:$0xf]
  %v1468 = vld [vmem:[%s2 + $0x48] sm:$0xf]
  %v1469 = vld [vmem:[%s2 + $0x4c] sm:$0xf]
  %v1470 = vld [vmem:[%s2 + $0x50] sm:$0xf]
  %v1471 = vld [vmem:[%s2 + $0x54] sm:$0xf]
  %v1472 = vld [vmem:[%s2 + $0x58] sm:$0xf]
  %v1473 = vld [vmem:[%s2 + $0x5c] sm:$0xf]
  %v1474 = vld [vmem:[%s2 + $0x60] sm:$0xf]
  %v1475 = vld [vmem:[%s2 + $0x64] sm:$0xf]
  %v1476 = vld [vmem:[%s2 + $0x68] sm:$0xf]
  %v1477 = vld [vmem:[%s2 + $0x6c] sm:$0xf]
  %v1478 = vld [vmem:[%s2 + $0x70] sm:$0xf]
  %v1479 = vld [vmem:[%s2 + $0x74] sm:$0xf]
  %v1480 = vld [vmem:[%s2 + $0x78] sm:$0xf]
  %v1481 = vld [vmem:[%s2 + $0x7c] sm:$0xf]
  %v1482 = vld [vmem:[%s2 + $0x80] sm:$0xf]
  %v1483 = vld [vmem:[%s2 + $0x84] sm:$0xf]
  %v1484 = vld [vmem:[%s2 + $0x88] sm:$0xf]
  %v1485 = vld [vmem:[%s2 + $0x8c] sm:$0xf]
  %v1486 = vld [vmem:[%s2 + $0x90] sm:$0xf]
  %v1487 = vld [vmem:[%s2 + $0x94] sm:$0xf]
  %v1488 = vld [vmem:[%s2 + $0x98] sm:$0xf]
  %v1489 = vld [vmem:[%s2 + $0x9c] sm:$0xf]
  %v1490 = vld [vmem:[%s2 + $0xa0] sm:$0xf]
  %v1491 = vld [vmem:[%s2 + $0xa4] sm:$0xf]
  %v1492 = vld [vmem:[%s2 + $0xa8] sm:$0xf]
  %v1493 = vld [vmem:[%s2 + $0xac] sm:$0xf]
  %v1494 = vld [vmem:[%s2 + $0xb0] sm:$0xf]
  %v1495 = vld [vmem:[%s2 + $0xb4] sm:$0xf]
  %v1496 = vld [vmem:[%s2 + $0xb8] sm:$0xf]
  %v1497 = vld [vmem:[%s2 + $0xbc] sm:$0xf]
  %v1498 = vld [vmem:[%s2 + $0xc0] sm:$0xf]
  %v1499 = vld [vmem:[%s2 + $0xc4] sm:$0xf]
  %v1500 = vld [vmem:[%s2 + $0xc8] sm:$0xf]
  %v1501 = vld [vmem:[%s2 + $0xcc] sm:$0xf]
  %v1502 = vld [vmem:[%s2 + $0xd0] sm:$0xf]
  %v1503 = vld [vmem:[%s2 + $0xd4] sm:$0xf]
  %v1504 = vld [vmem:[%s2 + $0xd8] sm:$0xf]
  %v1505 = vld [vmem:[%s2 + $0xdc] sm:$0xf]
  %v1506 = vld [vmem:[%s2 + $0xe0] sm:$0xf]
  %v1507 = vld [vmem:[%s2 + $0xe4] sm:$0xf]
  %v1508 = vld [vmem:[%s2 + $0xe8] sm:$0xf]
  %v1509 = vld [vmem:[%s2 + $0xec] sm:$0xf]
  %v1510 = vld [vmem:[%s2 + $0xf0] sm:$0xf]
  %v1511 = vld [vmem:[%s2 + $0xf4] sm:$0xf]
  %v1512 = vld [vmem:[%s2 + $0xf8] sm:$0xf]
  %v1513 = vld [vmem:[%s2 + $0xfc] sm:$0xf]
  %v1514 = vld [vmem:[%s2 + $0x100] sm:$0xf]
  %v1515 = vld [vmem:[%s2 + $0x104] sm:$0xf]
  %v1516 = vld [vmem:[%s2 + $0x108] sm:$0xf]
  %v1517 = vld [vmem:[%s2 + $0x10c] sm:$0xf]
  %v1518 = vld [vmem:[%s2 + $0x110] sm:$0xf]
  %v1519 = vld [vmem:[%s2 + $0x114] sm:$0xf]
  %v1520 = vld [vmem:[%s2 + $0x118] sm:$0xf]
  %v1521 = vld [vmem:[%s2 + $0x11c] sm:$0xf]
  %v1522 = vld [vmem:[%s2 + $0x120] sm:$0xf]
  %v1523 = vld [vmem:[%s2 + $0x124] sm:$0xf]
  %v1524 = vld [vmem:[%s2 + $0x128] sm:$0xf]
  %v1525 = vld [vmem:[%s2 + $0x12c] sm:$0xf]
  %v1526 = vld [vmem:[%s2 + $0x130] sm:$0xf]
  %v1527 = vld [vmem:[%s2 + $0x134] sm:$0xf]
  %v1528 = vld [vmem:[%s2 + $0x138] sm:$0xf]
  %v1529 = vld [vmem:[%s2 + $0x13c] sm:$0xf]
  %v1610 = vunpack.c.l.b16 %v1450
  %v1611 = vunpack.c.l.b16 %v1451
  %v1612 = vunpack.c.l.b16 %v1452
  %v1613 = vunpack.c.l.b16 %v1453
  %v1614 = vunpack.c.l.b16 %v1454
  %v1615 = vunpack.c.l.b16 %v1455
  %v1616 = vunpack.c.l.b16 %v1456
  %v1617 = vunpack.c.l.b16 %v1457
  %v1618 = vunpack.c.l.b16 %v1458
  %v1619 = vunpack.c.l.b16 %v1459
  %v1620 = vunpack.c.l.b16 %v1460
  %v1621 = vunpack.c.l.b16 %v1461
  %v1622 = vunpack.c.l.b16 %v1462
  %v1623 = vunpack.c.l.b16 %v1463
  %v1624 = vunpack.c.l.b16 %v1464
  %v1625 = vunpack.c.l.b16 %v1465
  %v1626 = vunpack.c.l.b16 %v1466
  %v1627 = vunpack.c.l.b16 %v1467
  %v1628 = vunpack.c.l.b16 %v1468
  %v1629 = vunpack.c.l.b16 %v1469
  %v1630 = vunpack.c.l.b16 %v1470
  %v1631 = vunpack.c.l.b16 %v1471
  %v1632 = vunpack.c.l.b16 %v1472
  %v1633 = vunpack.c.l.b16 %v1473
  %v1634 = vunpack.c.l.b16 %v1474
  %v1635 = vunpack.c.l.b16 %v1475
  %v1636 = vunpack.c.l.b16 %v1476
  %v1637 = vunpack.c.l.b16 %v1477
  %v1638 = vunpack.c.l.b16 %v1478
  %v1639 = vunpack.c.l.b16 %v1479
  %v1640 = vunpack.c.l.b16 %v1480
  %v1641 = vunpack.c.l.b16 %v1481
  %v1642 = vunpack.c.l.b16 %v1482
  %v1643 = vunpack.c.l.b16 %v1483
  %v1644 = vunpack.c.l.b16 %v1484
  %v1645 = vunpack.c.l.b16 %v1485
  %v1646 = vunpack.c.l.b16 %v1486
  %v1647 = vunpack.c.l.b16 %v1487
  %v1648 = vunpack.c.l.b16 %v1488
  %v1649 = vunpack.c.l.b16 %v1489
  %v1650 = vunpack.c.l.b16 %v1490
  %v1651 = vunpack.c.l.b16 %v1491
  %v1652 = vunpack.c.l.b16 %v1492
  %v1653 = vunpack.c.l.b16 %v1493
  %v1654 = vunpack.c.l.b16 %v1494
  %v1655 = vunpack.c.l.b16 %v1495
  %v1656 = vunpack.c.l.b16 %v1496
  %v1657 = vunpack.c.l.b16 %v1497
  %v1658 = vunpack.c.l.b16 %v1498
  %v1659 = vunpack.c.l.b16 %v1499
  %v1660 = vunpack.c.l.b16 %v1500
  %v1661 = vunpack.c.l.b16 %v1501
  %v1662 = vunpack.c.l.b16 %v1502
  %v1663 = vunpack.c.l.b16 %v1503
  %v1664 = vunpack.c.l.b16 %v1504
  %v1665 = vunpack.c.l.b16 %v1505
  %v1666 = vunpack.c.l.b16 %v1506
  %v1667 = vunpack.c.l.b16 %v1507
  %v1668 = vunpack.c.l.b16 %v1508
  %v1669 = vunpack.c.l.b16 %v1509
  %v1670 = vunpack.c.l.b16 %v1510
  %v1671 = vunpack.c.l.b16 %v1511
  %v1672 = vunpack.c.l.b16 %v1512
  %v1673 = vunpack.c.l.b16 %v1513
  %v1674 = vunpack.c.l.b16 %v1514
  %v1675 = vunpack.c.l.b16 %v1515
  %v1676 = vunpack.c.l.b16 %v1516
  %v1677 = vunpack.c.l.b16 %v1517
  %v1678 = vunpack.c.l.b16 %v1518
  %v1679 = vunpack.c.l.b16 %v1519
  %v1680 = vunpack.c.l.b16 %v1520
  %v1681 = vunpack.c.l.b16 %v1521
  %v1682 = vunpack.c.l.b16 %v1522
  %v1683 = vunpack.c.l.b16 %v1523
  %v1684 = vunpack.c.l.b16 %v1524
  %v1685 = vunpack.c.l.b16 %v1525
  %v1686 = vunpack.c.l.b16 %v1526
  %v1687 = vunpack.c.l.b16 %v1527
  %v1688 = vunpack.c.l.b16 %v1528
  %v1689 = vunpack.c.l.b16 %v1529
  %v1690 = vpack.c.b16 %v1611, %v1610
  %v1691 = vpack.c.b16 %v1613, %v1612
  %v1692 = vpack.c.b16 %v1615, %v1614
  %v1693 = vpack.c.b16 %v1617, %v1616
  %v1694 = vpack.c.b16 %v1619, %v1618
  %v1695 = vpack.c.b16 %v1621, %v1620
  %v1696 = vpack.c.b16 %v1623, %v1622
  %v1697 = vpack.c.b16 %v1625, %v1624
  %v1698 = vpack.c.b16 %v1627, %v1626
  %v1699 = vpack.c.b16 %v1629, %v1628
  %v1700 = vpack.c.b16 %v1631, %v1630
  %v1701 = vpack.c.b16 %v1633, %v1632
  %v1702 = vpack.c.b16 %v1635, %v1634
  %v1703 = vpack.c.b16 %v1637, %v1636
  %v1704 = vpack.c.b16 %v1639, %v1638
  %v1705 = vpack.c.b16 %v1641, %v1640
  %v1706 = vpack.c.b16 %v1643, %v1642
  %v1707 = vpack.c.b16 %v1645, %v1644
  %v1708 = vpack.c.b16 %v1647, %v1646
  %v1709 = vpack.c.b16 %v1649, %v1648
  %v1710 = vpack.c.b16 %v1651, %v1650
  %v1711 = vpack.c.b16 %v1653, %v1652
  %v1712 = vpack.c.b16 %v1655, %v1654
  %v1713 = vpack.c.b16 %v1657, %v1656
  %v1714 = vpack.c.b16 %v1659, %v1658
  %v1715 = vpack.c.b16 %v1661, %v1660
  %v1716 = vpack.c.b16 %v1663, %v1662
  %v1717 = vpack.c.b16 %v1665, %v1664
  %v1718 = vpack.c.b16 %v1667, %v1666
  %v1719 = vpack.c.b16 %v1669, %v1668
  %v1720 = vpack.c.b16 %v1671, %v1670
  %v1721 = vpack.c.b16 %v1673, %v1672
  %v1722 = vpack.c.b16 %v1675, %v1674
  %v1723 = vpack.c.b16 %v1677, %v1676
  %v1724 = vpack.c.b16 %v1679, %v1678
  %v1725 = vpack.c.b16 %v1681, %v1680
  %v1726 = vpack.c.b16 %v1683, %v1682
  %v1727 = vpack.c.b16 %v1685, %v1684
  %v1728 = vpack.c.b16 %v1687, %v1686
  %v1729 = vpack.c.b16 %v1689, %v1688
  %1770 = vmatprep.subr.bf16.mxu0 0
  %1771 = vmatpush1.bf16.msra.mxu0 %v1690
  %1772 = vmatprep.subr.bf16.mxu0 0
  %1773 = vmatpush1.bf16.msra.mxu0 %v1691
  %1774 = vmatprep.subr.bf16.mxu0 0
  %1775 = vmatpush1.bf16.msra.mxu0 %v1692
  %1776 = vmatprep.subr.bf16.mxu0 0
  %1777 = vmatpush1.bf16.msra.mxu0 %v1693
  %1778 = vmatprep.subr.bf16.mxu0 0
  %1779 = vmatpush1.bf16.msra.mxu0 %v1694
  %1780 = vmatprep.subr.bf16.mxu0 0
  %1781 = vmatpush1.bf16.msra.mxu0 %v1695
  %1782 = vmatprep.subr.bf16.mxu0 0
  %1783 = vmatpush1.bf16.msra.mxu0 %v1696
  %1784 = vmatprep.subr.bf16.mxu0 0
  %1785 = vmatpush1.bf16.msra.mxu0 %v1697
  %1786 = vmatprep.subr.bf16.mxu0 0
  %1787 = vmatpush1.bf16.msra.mxu0 %v1698
  %1788 = vmatprep.subr.bf16.mxu0 0
  %1789 = vmatpush1.bf16.msra.mxu0 %v1699
  %1790 = vmatprep.subr.bf16.mxu0 0
  %1791 = vmatpush1.bf16.msra.mxu0 %v1700
  %1792 = vmatprep.subr.bf16.mxu0 0
  %1793 = vmatpush1.bf16.msra.mxu0 %v1701
  %1794 = vmatprep.subr.bf16.mxu0 0
  %1795 = vmatpush1.bf16.msra.mxu0 %v1702
  %1796 = vmatprep.subr.bf16.mxu0 0
  %1797 = vmatpush1.bf16.msra.mxu0 %v1703
  %1798 = vmatprep.subr.bf16.mxu0 0
  %1799 = vmatpush1.bf16.msra.mxu0 %v1704
  %1800 = vmatprep.subr.bf16.mxu0 0
  %1801 = vmatpush1.bf16.msra.mxu0 %v1705
  %1802 = vmatprep.mubr.bf16.mxu0 %v1391
  %1803 = vmatmul.mubr.bf16.gmra.mrb[0].mxu0 %v1390
  %v1804 = vpop.f32.mrb[0].mxu0
  %v1805 = vadd.f32 0.0, %v1804
  %v1806 = vpop.f32.mrb[0].mxu0
  %v1807 = vpop.f32.mrb[0].mxu0
  %v1808 = vadd.f32 0.0, %v1807
  %v1809 = vpop.f32.mrb[0].mxu0
  %1810 = vmatprep.mubr.bf16.mxu0 %v1396
  %1811 = vmatmul.mubr.bf16.gmra.mrb[0].mxu0 %v1395
  %v1812 = vpop.f32.mrb[0].mxu0
  %v1813 = vadd.f32 0.0, %v1812
  %v1814 = vpop.f32.mrb[0].mxu0
  %v1815 = vpop.f32.mrb[0].mxu0
  %v1816 = vadd.f32 0.0, %v1815
  %v1817 = vpop.f32.mrb[0].mxu0
  %1818 = vmatprep.mubr.bf16.mxu0 %v1401
  %1819 = vmatmul.mubr.bf16.gmra.mrb[0].mxu0 %v1400
  %v1820 = vpop.f32.mrb[0].mxu0
  %v1821 = vadd.f32 0.0, %v1820
  %v1822 = vpop.f32.mrb[0].mxu0
  %v1823 = vpop.f32.mrb[0].mxu0
  %v1824 = vadd.f32 0.0, %v1823
  %v1825 = vpop.f32.mrb[0].mxu0
  %1826 = vmatprep.mubr.bf16.mxu0 %v1406
  %1827 = vmatmul.mubr.bf16.gmra.mrb[0].mxu0 %v1405
  %v1828 = vpop.f32.mrb[0].mxu0
  %v1829 = vadd.f32 0.0, %v1828
  %v1830 = vpop.f32.mrb[0].mxu0
  %v1831 = vpop.f32.mrb[0].mxu0
  %v1832 = vadd.f32 0.0, %v1831
  %v1833 = vpop.f32.mrb[0].mxu0
  %1834 = vmatprep.mubr.bf16.mxu0 %v1411
  %1835 = vmatmul.mubr.bf16.gmra.mrb[0].mxu0 %v1410
  %v1836 = vpop.f32.mrb[0].mxu0
  %v1837 = vadd.f32 0.0, %v1836
  %v1838 = vpop.f32.mrb[0].mxu0
  %v1839 = vpop.f32.mrb[0].mxu0
  %v1840 = vadd.f32 0.0, %v1839
  %v1841 = vpop.f32.mrb[0].mxu0
  %1842 = vmatprep.mubr.bf16.mxu0 %v1416
  %1843 = vmatmul.mubr.bf16.gmra.mrb[0].mxu0 %v1415
  %v1844 = vpop.f32.mrb[0].mxu0
  %v1845 = vadd.f32 0.0, %v1844
  %v1846 = vpop.f32.mrb[0].mxu0
  %v1847 = vpop.f32.mrb[0].mxu0
  %v1848 = vadd.f32 0.0, %v1847
  %v1849 = vpop.f32.mrb[0].mxu0
  %1850 = vmatprep.mubr.bf16.mxu0 %v1421
  %1851 = vmatmul.mubr.bf16.gmra.mrb[0].mxu0 %v1420
  %v1852 = vpop.f32.mrb[0].mxu0
  %v1853 = vadd.f32 0.0, %v1852
  %v1854 = vpop.f32.mrb[0].mxu0
  %v1855 = vpop.f32.mrb[0].mxu0
  %v1856 = vadd.f32 0.0, %v1855
  %v1857 = vpop.f32.mrb[0].mxu0
  %1858 = vmatprep.mubr.bf16.mxu0 %v1426
  %1859 = vmatmul.mubr.bf16.gmra.mrb[0].mxu0 %v1425
  %v1860 = vpop.f32.mrb[0].mxu0
  %v1861 = vadd.f32 0.0, %v1860
  %v1862 = vpop.f32.mrb[0].mxu0
  %v1863 = vpop.f32.mrb[0].mxu0
  %v1864 = vadd.f32 0.0, %v1863
  %v1865 = vpop.f32.mrb[0].mxu0
  %1866 = vmatprep.mubr.bf16.mxu0 %v1431
  %1867 = vmatmul.mubr.bf16.gmra.mrb[0].mxu0 %v1430
  %v1868 = vpop.f32.mrb[0].mxu0
  %v1869 = vadd.f32 0.0, %v1868
  %v1870 = vpop.f32.mrb[0].mxu0
  %v1871 = vpop.f32.mrb[0].mxu0
  %v1872 = vadd.f32 0.0, %v1871
  %v1873 = vpop.f32.mrb[0].mxu0
  %1874 = vmatprep.mubr.bf16.mxu0 %v1436
  %1875 = vmatmul.mubr.bf16.gmra.mrb[0].mxu0 %v1435
  %v1876 = vpop.f32.mrb[0].mxu0
  %v1877 = vadd.f32 0.0, %v1876
  %v1878 = vpop.f32.mrb[0].mxu0
  %v1879 = vpop.f32.mrb[0].mxu0
  %v1880 = vadd.f32 0.0, %v1879
  %v1881 = vpop.f32.mrb[0].mxu0
  %1882 = vmatprep.mubr.bf16.mxu0 %v1441
  %1883 = vmatmul.mubr.bf16.gmra.mrb[0].mxu0 %v1440
  %v1884 = vpop.f32.mrb[0].mxu0
  %v1885 = vadd.f32 0.0, %v1884
  %v1886 = vpop.f32.mrb[0].mxu0
  %v1887 = vpop.f32.mrb[0].mxu0
  %v1888 = vadd.f32 0.0, %v1887
  %v1889 = vpop.f32.mrb[0].mxu0
  %1890 = vmatprep.mubr.bf16.mxu0 %v1446
  %1891 = vmatmul.mubr.bf16.gmra.mrb[0].mxu0 %v1445
  %v1892 = vpop.f32.mrb[0].mxu0
  %v1893 = vadd.f32 0.0, %v1892
  %v1894 = vpop.f32.mrb[0].mxu0
  %v1895 = vpop.f32.mrb[0].mxu0
  %v1896 = vadd.f32 0.0, %v1895
  %v1897 = vpop.f32.mrb[0].mxu0
  %1898 = vdwg.mxu0
  %1899 = vmatprep.subr.bf16.mxu0 0
  %1900 = vmatpush1.bf16.msra.mxu0 %v1706
  %1901 = vmatprep.subr.bf16.mxu0 0
  %1902 = vmatpush1.bf16.msra.mxu0 %v1707
  %1903 = vmatprep.subr.bf16.mxu0 0
  %1904 = vmatpush1.bf16.msra.mxu0 %v1708
  %1905 = vmatprep.subr.bf16.mxu0 0
  %1906 = vmatpush1.bf16.msra.mxu0 %v1709
  %1907 = vmatprep.subr.bf16.mxu0 0
  %1908 = vmatpush1.bf16.msra.mxu0 %v1710
  %1909 = vmatprep.subr.bf16.mxu0 0
  %1910 = vmatpush1.bf16.msra.mxu0 %v1711
  %1911 = vmatprep.subr.bf16.mxu0 0
  %1912 = vmatpush1.bf16.msra.mxu0 %v1712
  %1913 = vmatprep.subr.bf16.mxu0 0
  %1914 = vmatpush1.bf16.msra.mxu0 %v1713
  %1915 = vmatprep.subr.bf16.mxu0 0
  %1916 = vmatpush1.bf16.msra.mxu0 %v1714
  %1917 = vmatprep.subr.bf16.mxu0 0
  %1918 = vmatpush1.bf16.msra.mxu0 %v1715
  %1919 = vmatprep.subr.bf16.mxu0 0
  %1920 = vmatpush1.bf16.msra.mxu0 %v1716
  %1921 = vmatprep.subr.bf16.mxu0 0
  %1922 = vmatpush1.bf16.msra.mxu0 %v1717
  %1923 = vmatprep.subr.bf16.mxu0 0
  %1924 = vmatpush1.bf16.msra.mxu0 %v1718
  %1925 = vmatprep.subr.bf16.mxu0 0
  %1926 = vmatpush1.bf16.msra.mxu0 %v1719
  %1927 = vmatprep.subr.bf16.mxu0 0
  %1928 = vmatpush1.bf16.msra.mxu0 %v1720
  %1929 = vmatprep.subr.bf16.mxu0 0
  %1930 = vmatpush1.bf16.msra.mxu0 %v1721
  %1931 = vmatprep.mubr.bf16.mxu0 %v1393
  %1932 = vmatmul.mubr.bf16.gmra.mrb[0].mxu0 %v1392
  %v1933 = vpop.f32.mrb[0].mxu0
  %v1934 = vadd.f32 %v1805, %v1933
  %v1935 = vpop.f32.mrb[0].mxu0
  %v1936 = vpop.f32.mrb[0].mxu0
  %v1937 = vadd.f32 %v1808, %v1936
  %v1938 = vpop.f32.mrb[0].mxu0
  %1939 = vmatprep.mubr.bf16.mxu0 %v1398
  %1940 = vmatmul.mubr.bf16.gmra.mrb[0].mxu0 %v1397
  %v1941 = vpop.f32.mrb[0].mxu0
  %v1942 = vadd.f32 %v1813, %v1941
  %v1943 = vpop.f32.mrb[0].mxu0
  %v1944 = vpop.f32.mrb[0].mxu0
  %v1945 = vadd.f32 %v1816, %v1944
  %v1946 = vpop.f32.mrb[0].mxu0
  %1947 = vmatprep.mubr.bf16.mxu0 %v1403
  %1948 = vmatmul.mubr.bf16.gmra.mrb[0].mxu0 %v1402
  %v1949 = vpop.f32.mrb[0].mxu0
  %v1950 = vadd.f32 %v1821, %v1949
  %v1951 = vpop.f32.mrb[0].mxu0
  %v1952 = vpop.f32.mrb[0].mxu0
  %v1953 = vadd.f32 %v1824, %v1952
  %v1954 = vpop.f32.mrb[0].mxu0
  %1955 = vmatprep.mubr.bf16.mxu0 %v1408
  %1956 = vmatmul.mubr.bf16.gmra.mrb[0].mxu0 %v1407
  %v1957 = vpop.f32.mrb[0].mxu0
  %v1958 = vadd.f32 %v1829, %v1957
  %v1959 = vpop.f32.mrb[0].mxu0
  %v1960 = vpop.f32.mrb[0].mxu0
  %v1961 = vadd.f32 %v1832, %v1960
  %v1962 = vpop.f32.mrb[0].mxu0
  %1963 = vmatprep.mubr.bf16.mxu0 %v1413
  %1964 = vmatmul.mubr.bf16.gmra.mrb[0].mxu0 %v1412
  %v1965 = vpop.f32.mrb[0].mxu0
  %v1966 = vadd.f32 %v1837, %v1965
  %v1967 = vpop.f32.mrb[0].mxu0
  %v1968 = vpop.f32.mrb[0].mxu0
  %v1969 = vadd.f32 %v1840, %v1968
  %v1970 = vpop.f32.mrb[0].mxu0
  %1971 = vmatprep.mubr.bf16.mxu0 %v1418
  %1972 = vmatmul.mubr.bf16.gmra.mrb[0].mxu0 %v1417
  %v1973 = vpop.f32.mrb[0].mxu0
  %v1974 = vadd.f32 %v1845, %v1973
  %v1975 = vpop.f32.mrb[0].mxu0
  %v1976 = vpop.f32.mrb[0].mxu0
  %v1977 = vadd.f32 %v1848, %v1976
  %v1978 = vpop.f32.mrb[0].mxu0
  %1979 = vmatprep.mubr.bf16.mxu0 %v1423
  %1980 = vmatmul.mubr.bf16.gmra.mrb[0].mxu0 %v1422
  %v1981 = vpop.f32.mrb[0].mxu0
  %v1982 = vadd.f32 %v1853, %v1981
  %v1983 = vpop.f32.mrb[0].mxu0
  %v1984 = vpop.f32.mrb[0].mxu0
  %v1985 = vadd.f32 %v1856, %v1984
  %v1986 = vpop.f32.mrb[0].mxu0
  %1987 = vmatprep.mubr.bf16.mxu0 %v1428
  %1988 = vmatmul.mubr.bf16.gmra.mrb[0].mxu0 %v1427
  %v1989 = vpop.f32.mrb[0].mxu0
  %v1990 = vadd.f32 %v1861, %v1989
  %v1991 = vpop.f32.mrb[0].mxu0
  %v1992 = vpop.f32.mrb[0].mxu0
  %v1993 = vadd.f32 %v1864, %v1992
  %v1994 = vpop.f32.mrb[0].mxu0
  %1995 = vmatprep.mubr.bf16.mxu0 %v1433
  %1996 = vmatmul.mubr.bf16.gmra.mrb[0].mxu0 %v1432
  %v1997 = vpop.f32.mrb[0].mxu0
  %v1998 = vadd.f32 %v1869, %v1997
  %v1999 = vpop.f32.mrb[0].mxu0
  %v2000 = vpop.f32.mrb[0].mxu0
  %v2001 = vadd.f32 %v1872, %v2000
  %v2002 = vpop.f32.mrb[0].mxu0
  %2003 = vmatprep.mubr.bf16.mxu0 %v1438
  %2004 = vmatmul.mubr.bf16.gmra.mrb[0].mxu0 %v1437
  %v2005 = vpop.f32.mrb[0].mxu0
  %v2006 = vadd.f32 %v1877, %v2005
  %v2007 = vpop.f32.mrb[0].mxu0
  %v2008 = vpop.f32.mrb[0].mxu0
  %v2009 = vadd.f32 %v1880, %v2008
  %v2010 = vpop.f32.mrb[0].mxu0
  %2011 = vmatprep.mubr.bf16.mxu0 %v1443
  %2012 = vmatmul.mubr.bf16.gmra.mrb[0].mxu0 %v1442
  %v2013 = vpop.f32.mrb[0].mxu0
  %v2014 = vadd.f32 %v1885, %v2013
  %v2015 = vpop.f32.mrb[0].mxu0
  %v2016 = vpop.f32.mrb[0].mxu0
  %v2017 = vadd.f32 %v1888, %v2016
  %v2018 = vpop.f32.mrb[0].mxu0
  %2019 = vmatprep.mubr.bf16.mxu0 %v1448
  %2020 = vmatmul.mubr.bf16.gmra.mrb[0].mxu0 %v1447
  %v2021 = vpop.f32.mrb[0].mxu0
  %v2022 = vadd.f32 %v1893, %v2021
  %v2023 = vpop.f32.mrb[0].mxu0
  %v2024 = vpop.f32.mrb[0].mxu0
  %v2025 = vadd.f32 %v1896, %v2024
  %v2026 = vpop.f32.mrb[0].mxu0
  %2027 = vdwg.mxu0
  %2028 = vmatprep.subr.bf16.mxu0 0
  %2029 = vmatpush1.bf16.msra.mxu0 %v1722
  %2030 = vmatprep.subr.bf16.mxu0 0
  %2031 = vmatpush1.bf16.msra.mxu0 %v1723
  %2032 = vmatprep.subr.bf16.mxu0 0
  %2033 = vmatpush1.bf16.msra.mxu0 %v1724
  %2034 = vmatprep.subr.bf16.mxu0 0
  %2035 = vmatpush1.bf16.msra.mxu0 %v1725
  %2036 = vmatprep.subr.bf16.mxu0 0
  %2037 = vmatpush1.bf16.msra.mxu0 %v1726
  %2038 = vmatprep.subr.bf16.mxu0 0
  %2039 = vmatpush1.bf16.msra.mxu0 %v1727
  %2040 = vmatprep.subr.bf16.mxu0 0
  %2041 = vmatpush1.bf16.msra.mxu0 %v1728
  %2042 = vmatprep.subr.bf16.mxu0 0
  %2043 = vmatpush1.bf16.msra.mxu0 %v1729
  %2044 = vmatprep.subr.bf16.mxu0 0
  %2045 = vmatpush1.bf16.msra.mxu0 0
  %2046 = vmatprep.subr.bf16.mxu0 0
  %2047 = vmatpush1.bf16.msra.mxu0 0
  %2048 = vmatprep.subr.bf16.mxu0 0
  %2049 = vmatpush1.bf16.msra.mxu0 0
  %2050 = vmatprep.subr.bf16.mxu0 0
  %2051 = vmatpush1.bf16.msra.mxu0 0
  %2052 = vmatprep.subr.bf16.mxu0 0
  %2053 = vmatpush1.bf16.msra.mxu0 0
  %2054 = vmatprep.subr.bf16.mxu0 0
  %2055 = vmatpush1.bf16.msra.mxu0 0
  %2056 = vmatprep.subr.bf16.mxu0 0
  %2057 = vmatpush1.bf16.msra.mxu0 0
  %2058 = vmatprep.subr.bf16.mxu0 0
  %2059 = vmatpush1.bf16.msra.mxu0 0
  %2060 = vmatprep.mubr.bf16.mxu0 0
  %2061 = vmatmul.mubr.bf16.gmra.mrb[0].mxu0 %v1394
  %v2062 = vpop.f32.mrb[0].mxu0
  %v2063 = vadd.f32 %v1934, %v2062
  %v2064 = vpop.f32.mrb[0].mxu0
  %v2065 = vpop.f32.mrb[0].mxu0
  %v2066 = vadd.f32 %v1937, %v2065
  %v2067 = vpop.f32.mrb[0].mxu0
  %2068 = vmatprep.mubr.bf16.mxu0 0
  %2069 = vmatmul.mubr.bf16.gmra.mrb[0].mxu0 %v1399
  %v2070 = vpop.f32.mrb[0].mxu0
  %v2071 = vadd.f32 %v1942, %v2070
  %v2072 = vpop.f32.mrb[0].mxu0
  %v2073 = vpop.f32.mrb[0].mxu0
  %v2074 = vadd.f32 %v1945, %v2073
  %v2075 = vpop.f32.mrb[0].mxu0
  %2076 = vmatprep.mubr.bf16.mxu0 0
  %2077 = vmatmul.mubr.bf16.gmra.mrb[0].mxu0 %v1404
  %v2078 = vpop.f32.mrb[0].mxu0
  %v2079 = vadd.f32 %v1950, %v2078
  %v2080 = vpop.f32.mrb[0].mxu0
  %v2081 = vpop.f32.mrb[0].mxu0
  %v2082 = vadd.f32 %v1953, %v2081
  %v2083 = vpop.f32.mrb[0].mxu0
  %2084 = vmatprep.mubr.bf16.mxu0 0
  %2085 = vmatmul.mubr.bf16.gmra.mrb[0].mxu0 %v1409
  %v2086 = vpop.f32.mrb[0].mxu0
  %v2087 = vadd.f32 %v1958, %v2086
  %v2088 = vpop.f32.mrb[0].mxu0
  %v2089 = vpop.f32.mrb[0].mxu0
  %v2090 = vadd.f32 %v1961, %v2089
  %v2091 = vpop.f32.mrb[0].mxu0
  %2092 = vmatprep.mubr.bf16.mxu0 0
  %2093 = vmatmul.mubr.bf16.gmra.mrb[0].mxu0 %v1414
  %v2094 = vpop.f32.mrb[0].mxu0
  %v2095 = vadd.f32 %v1966, %v2094
  %v2096 = vpop.f32.mrb[0].mxu0
  %v2097 = vpop.f32.mrb[0].mxu0
  %v2098 = vadd.f32 %v1969, %v2097
  %v2099 = vpop.f32.mrb[0].mxu0
  %2100 = vmatprep.mubr.bf16.mxu0 0
  %2101 = vmatmul.mubr.bf16.gmra.mrb[0].mxu0 %v1419
  %v2102 = vpop.f32.mrb[0].mxu0
  %v2103 = vadd.f32 %v1974, %v2102
  %v2104 = vpop.f32.mrb[0].mxu0
  %v2105 = vpop.f32.mrb[0].mxu0
  %v2106 = vadd.f32 %v1977, %v2105
  %v2107 = vpop.f32.mrb[0].mxu0
  %2108 = vmatprep.mubr.bf16.mxu0 0
  %2109 = vmatmul.mubr.bf16.gmra.mrb[0].mxu0 %v1424
  %v2110 = vpop.f32.mrb[0].mxu0
  %v2111 = vadd.f32 %v1982, %v2110
  %v2112 = vpop.f32.mrb[0].mxu0
  %v2113 = vpop.f32.mrb[0].mxu0
  %v2114 = vadd.f32 %v1985, %v2113
  %v2115 = vpop.f32.mrb[0].mxu0
  %2116 = vmatprep.mubr.bf16.mxu0 0
  %2117 = vmatmul.mubr.bf16.gmra.mrb[0].mxu0 %v1429
  %v2118 = vpop.f32.mrb[0].mxu0
  %v2119 = vadd.f32 %v1990, %v2118
  %v2120 = vpop.f32.mrb[0].mxu0
  %v2121 = vpop.f32.mrb[0].mxu0
  %v2122 = vadd.f32 %v1993, %v2121
  %v2123 = vpop.f32.mrb[0].mxu0
  %2124 = vmatprep.mubr.bf16.mxu0 0
  %2125 = vmatmul.mubr.bf16.gmra.mrb[0].mxu0 %v1434
  %v2126 = vpop.f32.mrb[0].mxu0
  %v2127 = vadd.f32 %v1998, %v2126
  %v2128 = vpop.f32.mrb[0].mxu0
  %v2129 = vpop.f32.mrb[0].mxu0
  %v2130 = vadd.f32 %v2001, %v2129
  %v2131 = vpop.f32.mrb[0].mxu0
  %2132 = vmatprep.mubr.bf16.mxu0 0
  %2133 = vmatmul.mubr.bf16.gmra.mrb[0].mxu0 %v1439
  %v2134 = vpop.f32.mrb[0].mxu0
  %v2135 = vadd.f32 %v2006, %v2134
  %v2136 = vpop.f32.mrb[0].mxu0
  %v2137 = vpop.f32.mrb[0].mxu0
  %v2138 = vadd.f32 %v2009, %v2137
  %v2139 = vpop.f32.mrb[0].mxu0
  %2140 = vmatprep.mubr.bf16.mxu0 0
  %2141 = vmatmul.mubr.bf16.gmra.mrb[0].mxu0 %v1444
  %v2142 = vpop.f32.mrb[0].mxu0
  %v2143 = vadd.f32 %v2014, %v2142
  %v2144 = vpop.f32.mrb[0].mxu0
  %v2145 = vpop.f32.mrb[0].mxu0
  %v2146 = vadd.f32 %v2017, %v2145
  %v2147 = vpop.f32.mrb[0].mxu0
  %2148 = vmatprep.mubr.bf16.mxu0 0
  %2149 = vmatmul.mubr.bf16.gmra.mrb[0].mxu0 %v1449
  %v2150 = vpop.f32.mrb[0].mxu0
  %v2151 = vadd.f32 %v2022, %v2150
  %v2152 = vpop.f32.mrb[0].mxu0
  %v2153 = vpop.f32.mrb[0].mxu0
  %v2154 = vadd.f32 %v2025, %v2153
  %v2155 = vpop.f32.mrb[0].mxu0
  %2156 = vdwg.mxu0
  %v2157 = vld [vmem:[%s3] sm:$0xff]
  %v2158 = vld [vmem:[%s3 + $0x8] sm:$0xff]
  %v2159 = vld [vmem:[%s3 + $0x10] sm:$0xff]
  %v2160 = vadd.f32 %v2063, %v2157
  %v2161 = vadd.f32 %v2066, %v2158
  %v2162 = vadd.f32 %v2071, %v2159
  %v2163 = vadd.f32 %v2074, %v2157
  %v2164 = vadd.f32 %v2079, %v2158
  %v2165 = vadd.f32 %v2082, %v2159
  %v2166 = vadd.f32 %v2087, %v2157
  %v2167 = vadd.f32 %v2090, %v2158
  %v2168 = vadd.f32 %v2095, %v2159
  %v2169 = vadd.f32 %v2098, %v2157
  %v2170 = vadd.f32 %v2103, %v2158
  %v2171 = vadd.f32 %v2106, %v2159
  %v2172 = vadd.f32 %v2111, %v2157
  %v2173 = vadd.f32 %v2114, %v2158
  %v2174 = vadd.f32 %v2119, %v2159
  %v2175 = vadd.f32 %v2122, %v2157
  %v2176 = vadd.f32 %v2127, %v2158
  %v2177 = vadd.f32 %v2130, %v2159
  %v2178 = vadd.f32 %v2135, %v2157
  %v2179 = vadd.f32 %v2138, %v2158
  %v2180 = vadd.f32 %v2143, %v2159
  %v2181 = vadd.f32 %v2146, %v2157
  %v2182 = vadd.f32 %v2151, %v2158
  %v2183 = vadd.f32 %v2154, %v2159
  %v2184 = vmax.f32 %v2160, 0.0
  %v2185 = vmax.f32 %v2161, 0.0
  %v2186 = vmax.f32 %v2162, 0.0
  %v2187 = vmax.f32 %v2163, 0.0
  %v2188 = vmax.f32 %v2164, 0.0
  %v2189 = vmax.f32 %v2165, 0.0
  %v2190 = vmax.f32 %v2166, 0.0
  %v2191 = vmax.f32 %v2167, 0.0
  %v2192 = vmax.f32 %v2168, 0.0
  %v2193 = vmax.f32 %v2169, 0.0
  %v2194 = vmax.f32 %v2170, 0.0
  %v2195 = vmax.f32 %v2171, 0.0
  %v2196 = vmax.f32 %v2172, 0.0
  %v2197 = vmax.f32 %v2173, 0.0
  %v2198 = vmax.f32 %v2174, 0.0
  %v2199 = vmax.f32 %v2175, 0.0
  %v2200 = vmax.f32 %v2176, 0.0
  %v2201 = vmax.f32 %v2177, 0.0
  %v2202 = vmax.f32 %v2178, 0.0
  %v2203 = vmax.f32 %v2179, 0.0
  %v2204 = vmax.f32 %v2180, 0.0
  %v2205 = vmax.f32 %v2181, 0.0
  %v2206 = vmax.f32 %v2182, 0.0
  %v2207 = vmax.f32 %v2183, 0.0
  %v2208 = vmax.f32 %v2184, %v2185
  %v2209 = vmax.f32 %v2208, %v2186
  %v2210 = vrot.slane %v2209, 4
  %v2211 = vmax.f32 %v2209, %v2210
  %v2212 = vrot.slane %v2211, 2
  %v2213 = vmax.f32 %v2211, %v2212
  %v2214 = vrot.slane %v2213, 1
  %v2215 = vmax.f32 %v2213, %v2214
  %v2216 = vmax.f32 %v2187, %v2188
  %v2217 = vmax.f32 %v2216, %v2189
  %v2218 = vrot.slane %v2217, 4
  %v2219 = vmax.f32 %v2217, %v2218
  %v2220 = vrot.slane %v2219, 2
  %v2221 = vmax.f32 %v2219, %v2220
  %v2222 = vrot.slane %v2221, 1
  %v2223 = vmax.f32 %v2221, %v2222
  %v2224 = vmax.f32 %v2190, %v2191
  %v2225 = vmax.f32 %v2224, %v2192
  %v2226 = vrot.slane %v2225, 4
  %v2227 = vmax.f32 %v2225, %v2226
  %v2228 = vrot.slane %v2227, 2
  %v2229 = vmax.f32 %v2227, %v2228
  %v2230 = vrot.slane %v2229, 1
  %v2231 = vmax.f32 %v2229, %v2230
  %v2232 = vmax.f32 %v2193, %v2194
  %v2233 = vmax.f32 %v2232, %v2195
  %v2234 = vrot.slane %v2233, 4
  %v2235 = vmax.f32 %v2233, %v2234
  %v2236 = vrot.slane %v2235, 2
  %v2237 = vmax.f32 %v2235, %v2236
  %v2238 = vrot.slane %v2237, 1
  %v2239 = vmax.f32 %v2237, %v2238
  %v2240 = vmax.f32 %v2196, %v2197
  %v2241 = vmax.f32 %v2240, %v2198
  %v2242 = vrot.slane %v2241, 4
  %v2243 = vmax.f32 %v2241, %v2242
  %v2244 = vrot.slane %v2243, 2
  %v2245 = vmax.f32 %v2243, %v2244
  %v2246 = vrot.slane %v2245, 1
  %v2247 = vmax.f32 %v2245, %v2246
  %v2248 = vmax.f32 %v2199, %v2200
  %v2249 = vmax.f32 %v2248, %v2201
  %v2250 = vrot.slane %v2249, 4
  %v2251 = vmax.f32 %v2249, %v2250
  %v2252 = vrot.slane %v2251, 2
  %v2253 = vmax.f32 %v2251, %v2252
  %v2254 = vrot.slane %v2253, 1
  %v2255 = vmax.f32 %v2253, %v2254
  %v2256 = vmax.f32 %v2202, %v2203
  %v2257 = vmax.f32 %v2256, %v2204
  %v2258 = vrot.slane %v2257, 4
  %v2259 = vmax.f32 %v2257, %v2258
  %v2260 = vrot.slane %v2259, 2
  %v2261 = vmax.f32 %v2259, %v2260
  %v2262 = vrot.slane %v2261, 1
  %v2263 = vmax.f32 %v2261, %v2262
  %v2264 = vmax.f32 %v2205, %v2206
  %v2265 = vmax.f32 %v2264, %v2207
  %v2266 = vrot.slane %v2265, 4
  %v2267 = vmax.f32 %v2265, %v2266
  %v2268 = vrot.slane %v2267, 2
  %v2269 = vmax.f32 %v2267, %v2268
  %v2270 = vrot.slane %v2269, 1
  %v2271 = vmax.f32 %v2269, %v2270
  %v2272 = vld [vmem:[%s4] sm:$0xff]
  %v2273 = vld [vmem:[%s4 + $0x8] sm:$0xff]
  %v2274 = vld [vmem:[%s4 + $0x10] sm:$0xff]
  %v2275 = vld [vmem:[%s4 + $0x18] sm:$0xff]
  %v2276 = vld [vmem:[%s4 + $0x20] sm:$0xff]
  %v2277 = vld [vmem:[%s4 + $0x28] sm:$0xff]
  %v2278 = vld [vmem:[%s4 + $0x30] sm:$0xff]
  %v2279 = vld [vmem:[%s4 + $0x38] sm:$0xff]
  %v2280 = vld [vmem:[%s4 + $0x40] sm:$0xff]
  %v2281 = vld [vmem:[%s4 + $0x48] sm:$0xff]
  %v2282 = vld [vmem:[%s4 + $0x50] sm:$0xff]
  %v2283 = vld [vmem:[%s4 + $0x58] sm:$0xff]
  %v2284 = vld [vmem:[%s4 + $0x60] sm:$0xff]
  %v2285 = vld [vmem:[%s4 + $0x68] sm:$0xff]
  %v2286 = vld [vmem:[%s4 + $0x70] sm:$0xff]
  %v2287 = vld [vmem:[%s4 + $0x78] sm:$0xff]
  %v2288 = vld [vmem:[%s5] sm:$0x1]
  %v2290 = vlaneseq
  %v2291 = vshrl.u32 %v2290, 7
  %v2292 = vsub.s32 0, %v2291
  %v2293 = vrot.slane %v2288, %v2292
  %vm2303 = vcmask 1041409
  %v2304 = vsel %vm2303, %v2223, %v2215
  %vm2305 = vcmask 1042434
  %v2306 = vsel %vm2305, %v2231, %v2304
  %vm2307 = vcmask 1043459
  %v2308 = vsel %vm2307, %v2239, %v2306
  %vm2309 = vcmask 1044484
  %v2310 = vsel %vm2309, %v2247, %v2308
  %vm2311 = vcmask 1045509
  %v2312 = vsel %vm2311, %v2255, %v2310
  %vm2313 = vcmask 1046534
  %v2314 = vsel %vm2313, %v2263, %v2312
  %vm2315 = vcmask 1047559
  %v2316 = vsel %vm2315, %v2271, %v2314
  %2318 = vmatprep.subr.mxu0 0.0
  %2319 = vmatpush1.msra.mxu0 %v2272
  %2320 = vmatprep.subr.mxu0 0.0
  %2321 = vmatpush1.msra.mxu0 %v2273
  %2322 = vmatprep.subr.mxu0 0.0
  %2323 = vmatpush1.msra.mxu0 %v2274
  %2324 = vmatprep.subr.mxu0 0.0
  %2325 = vmatpush1.msra.mxu0 %v2275
  %2326 = vmatprep.subr.mxu0 0.0
  %2327 = vmatpush1.msra.mxu0 %v2276
  %2328 = vmatprep.subr.mxu0 0.0
  %2329 = vmatpush1.msra.mxu0 %v2277
  %2330 = vmatprep.subr.mxu0 0.0
  %2331 = vmatpush1.msra.mxu0 %v2278
  %2332 = vmatprep.subr.mxu0 0.0
  %2333 = vmatpush1.msra.mxu0 %v2279
  %2334 = vmatprep.subr.mxu0 0.0
  %2335 = vmatpush1.msra.mxu0 %v2280
  %2336 = vmatprep.subr.mxu0 0.0
  %2337 = vmatpush1.msra.mxu0 %v2281
  %2338 = vmatprep.subr.mxu0 0.0
  %2339 = vmatpush1.msra.mxu0 %v2282
  %2340 = vmatprep.subr.mxu0 0.0
  %2341 = vmatpush1.msra.mxu0 %v2283
  %2342 = vmatprep.subr.mxu0 0.0
  %2343 = vmatpush1.msra.mxu0 %v2284
  %2344 = vmatprep.subr.mxu0 0.0
  %2345 = vmatpush1.msra.mxu0 %v2285
  %2346 = vmatprep.subr.mxu0 0.0
  %2347 = vmatpush1.msra.mxu0 %v2286
  %2348 = vmatprep.subr.mxu0 0.0
  %2349 = vmatpush1.msra.mxu0 %v2287
  %2350 = vmatprep.subr.mxu0 0.0
  %2351 = vmatpush1.msra.mxu0 0.0
  %2352 = vmatprep.subr.mxu0 0.0
  %2353 = vmatpush1.msra.mxu0 0.0
  %2354 = vmatprep.subr.mxu0 0.0
  %2355 = vmatpush1.msra.mxu0 0.0
  %2356 = vmatprep.subr.mxu0 0.0
  %2357 = vmatpush1.msra.mxu0 0.0
  %2358 = vmatprep.subr.mxu0 0.0
  %2359 = vmatpush1.msra.mxu0 0.0
  %2360 = vmatprep.subr.mxu0 0.0
  %2361 = vmatpush1.msra.mxu0 0.0
  %2362 = vmatprep.subr.mxu0 0.0
  %2363 = vmatpush1.msra.mxu0 0.0
  %2364 = vmatprep.subr.mxu0 0.0
  %2365 = vmatpush1.msra.mxu0 0.0
  %2366 = vmatprep.subr.mxu0 0.0
  %2367 = vmatpush1.msra.mxu0 0.0
  %2368 = vmatprep.subr.mxu0 0.0
  %2369 = vmatpush1.msra.mxu0 0.0
  %2370 = vmatprep.subr.mxu0 0.0
  %2371 = vmatpush1.msra.mxu0 0.0
  %2372 = vmatprep.subr.mxu0 0.0
  %2373 = vmatpush1.msra.mxu0 0.0
  %2374 = vmatprep.subr.mxu0 0.0
  %2375 = vmatpush1.msra.mxu0 0.0
  %2376 = vmatprep.subr.mxu0 0.0
  %2377 = vmatpush1.msra.mxu0 0.0
  %2378 = vmatprep.subr.mxu0 0.0
  %2379 = vmatpush1.msra.mxu0 0.0
  %2380 = vmatprep.subr.mxu0 0.0
  %2381 = vmatpush1.msra.mxu0 0.0
  %2382 = vmatprep.mubr.f32.mxu0 0.0
  %2383 = vmatmul.mubr.f32.gmra.mrb[0].mxu0 %v2316
  %v2384 = vpop.f32.mrb[0].mxu0
  %v2385 = vadd.f32 %v2293, %v2384
  %v2386 = vpop.f32.mrb[0].mxu0
  %2387 = vdwg.mxu0
  %2388 = vmax.xlane.f32.xlu0 %v2385
  %v2389 = vpop.xlane.xlu0 %2388
  %v2390 = vsub.f32 %v2385, %v2389
  %v2391 = vmul.f32 %v2390, 1.442695
  %v2392 = vpow.pop %v2391
  %2393 = vadd.xlane.f32.xlu0 %v2392
  %v2394 = vpop.xlane.xlu0 %2393
  %v2395 = vrcp.pop %v2394
  %v2396 = vmul.f32 %v2392, %v2395
  %2397 = vst [vmem:[%s6] sm:$0xff] %v2396
  // Predicated region
  $region26: #{cnn_rand_forward.1} parent=0 // pred_check
    _
  $region27: #{cnn_rand_forward.1} parent=0 // pred_check_branch
    %2399 = sbr.rel (0) target = $region29
  $region28: #{cnn_rand_forward.1} parent=0 // pred_region
    _
  $region29: #{cnn_rand_forward.1} parent=0 // pred_fallthru
    _
  // Predicated region
  $region30: #{cnn_rand_forward.1} parent=0 // pred_check
    _
  $region31: #{cnn_rand_forward.1} parent=0 // pred_check_branch
    %2401 = sbr.rel (0) target = $region33
  $region32: #{cnn_rand_forward.1} parent=0 // pred_region
    _
  $region33: #{cnn_rand_forward.1} parent=0 // pred_fallthru
    _

</llo_original>
